<compile_context>
chip_gen: v6e
topology: v6e:2x2x1
jax: 0.10.0
libtpu: 0.0.40
codegen_flags: <defaults>
</compile_context>

<pallas_src>
import functools

import jax
import jax.numpy as jnp
from jax.experimental import pallas as pl
from jax.experimental.pallas import tpu as pltpu

D_IN = 500
D_PAD = 512  # 500 padded up to a multiple of 128


def _round_up(n, m):
    return ((n + m - 1) // m) * m


def _pick_batch_tile(batch, block_b):
    """Rows per grid step.

    Multiples of 16 (bf16 sublane packing).  For batches big enough to split,
    aim for >= 2 grid tiles so the batch axis shards across both TensorCores on
    v7x; cap at block_b rows per tile to bound VMEM for intermediates.
    """
    if batch <= 32:
        return _round_up(batch, 16)  # tiny batch: single tile
    half = _round_up(pl.cdiv(batch, 2), 16)
    return min(block_b, half)


def domain_cl_kernel(x_ref, w1_ref, b1_ref, w2_ref, b2_ref, w3_ref, b3_ref, o_ref):
    x = x_ref[...]  # (TB, 512) bf16

    # hidden1 + ReLU  (bf16 MXU, f32 accumulation, f32 bias)
    h1 = jnp.dot(x, w1_ref[...], preferred_element_type=jnp.float32) + b1_ref[...]
    h1 = jnp.maximum(h1, 0.0).astype(jnp.bfloat16)

    # hidden2 + ReLU
    h2 = jnp.dot(h1, w2_ref[...], preferred_element_type=jnp.float32) + b2_ref[...]
    h2 = jnp.maximum(h2, 0.0)  # keep f32 for the final reduction

    # hidden3 (out_features == 1): VPU multiply + XLU lane reduce instead of a
    # width-1 MXU matmul.  w3_ref is the transposed weight row, shape (1, 512).
    logits = jnp.sum(h2 * w3_ref[...], axis=-1, keepdims=True) + b3_ref[...]

    o_ref[...] = jax.nn.sigmoid(logits).astype(o_ref.dtype)


def init_params(key):
    """Deterministic PyTorch-style init. Weights stored (in_features, out_features)."""
    def linear_init(k, fan_in, fan_out):
        kw, kb = jax.random.split(k)
        bound = 1.0 / jnp.sqrt(jnp.float32(fan_in))
        w = jax.random.uniform(kw, (fan_in, fan_out), jnp.float32, -bound, bound)
        b = jax.random.uniform(kb, (1, fan_out), jnp.float32, -bound, bound)
        return w, b

    k1, k2, k3 = jax.random.split(key, 3)
    w1, b1 = linear_init(k1, 500, 500)
    w2, b2 = linear_init(k2, 500, 500)
    w3, b3 = linear_init(k3, 500, 1)
    return (w1, b1, w2, b2, w3, b3)


def pack_params(params, d_pad=D_PAD):
    """Pad feature dims 500 -> 512 (zero-filled) and cast matmul weights to bf16.

    Zero padding guarantees the pad lanes contribute nothing through the ReLUs
    and the final reduction, so numerics match the unpadded model.
    """
    w1, b1, w2, b2, w3, b3 = params

    def pad2(a, rows, cols):
        out = jnp.zeros((rows, cols), a.dtype)
        return out.at[: a.shape[0], : a.shape[1]].set(a)

    w1p = pad2(w1, d_pad, d_pad).astype(jnp.bfloat16)
    w2p = pad2(w2, d_pad, d_pad).astype(jnp.bfloat16)
    b1p = pad2(b1, 1, d_pad)                      # f32, (1, 512)
    b2p = pad2(b2, 1, d_pad)                      # f32, (1, 512)
    w3r = pad2(w3.T, 1, d_pad)                    # f32, (1, 512) row for the VPU path
    b3p = b3.reshape(1, 1).astype(jnp.float32)    # f32, (1, 1)
    return (w1p, b1p, w2p, b2p, w3r, b3p)


def prepare_input(x, tb):
    """Cast+pad x -> (b_pad, D_PAD) bf16 as ONE fused XLA op (pad of a convert).

    In a production pipeline, keep the activation in this bf16 (b_pad, 512)
    layout upstream of the hot loop (fuse the cast into x's producer) so this
    pass disappears entirely.
    """
    B, F = x.shape
    b_pad = _round_up(B, tb)
    return jnp.pad(x.astype(jnp.bfloat16), ((0, b_pad - B), (0, D_PAD - F)))


@functools.partial(jax.jit, static_argnames=("block_b",))
def domain_cl_forward(x, packed_params, *, block_b=1024):
    """x: (B, 500) float32 -> (B, 1) float32."""
    w1, b1, w2, b2, w3r, b3 = packed_params
    B, _ = x.shape

    tb = _pick_batch_tile(B, block_b)
    xp = prepare_input(x, tb)
    b_pad = xp.shape[0]
    grid = (b_pad // tb,)

    # Advisory hint so XLA's scheduler overlaps the surrounding pad/cast of x
    # with the custom call.
    cost = pl.CostEstimate(
        flops=4 * b_pad * D_PAD * D_PAD + 2 * b_pad * D_PAD,
        transcendentals=b_pad,
        bytes_accessed=(
            b_pad * D_PAD * 2                # x (bf16)
            + 2 * D_PAD * D_PAD * 2          # w1, w2 (bf16)
            + (2 * D_PAD + D_PAD + 1) * 4    # b1, b2, w3 row, b3 (f32)
            + b_pad * 4                      # out (f32)
        ),
    )

    out = pl.pallas_call(
        domain_cl_kernel,
        out_shape=jax.ShapeDtypeStruct((b_pad, 1), jnp.float32),
        grid_spec=pltpu.PrefetchScalarGridSpec(
            num_scalar_prefetch=0,
            grid=grid,
            in_specs=[
                pl.BlockSpec((tb, D_PAD), lambda i: (i, 0)),      # x tile (moving)
                pl.BlockSpec((D_PAD, D_PAD), lambda i: (0, 0)),   # w1 (resident)
                pl.BlockSpec((1, D_PAD), lambda i: (0, 0)),       # b1 (resident)
                pl.BlockSpec((D_PAD, D_PAD), lambda i: (0, 0)),   # w2 (resident)
                pl.BlockSpec((1, D_PAD), lambda i: (0, 0)),       # b2 (resident)
                pl.BlockSpec((1, D_PAD), lambda i: (0, 0)),       # w3 row (resident)
                pl.BlockSpec((1, 1), lambda i: (0, 0)),           # b3 (resident)
            ],
            out_specs=pl.BlockSpec((tb, 1), lambda i: (i, 0)),
        ),
        compiler_params=pltpu.CompilerParams(
            dimension_semantics=("parallel",),  # shard batch tiles across TCs (v7x)
        ),
        cost_estimate=cost,
    )(xp, w1, b1, w2, b2, w3r, b3)

    # Padded rows (>= B) hold relu(b1)-derived garbage; this slice drops them.
    return out[:B]


def reference_forward(x, params):
    """Full-precision f32 reference (matches the PyTorch module semantics)."""
    w1, b1, w2, b2, w3, b3 = params
    h1 = jnp.maximum(x @ w1 + b1, 0.0)
    h2 = jnp.maximum(h1 @ w2 + b2, 0.0)
    return jax.nn.sigmoid(h2 @ w3 + b3)


if __name__ == "__main__":
    key = jax.random.PRNGKey(0)
    k_params, k_x1, k_x2 = jax.random.split(key, 3)

    params = init_params(k_params)
    packed = pack_params(params)

    # Small batch: single-tile path.
    B1 = 8
    x1 = jax.random.normal(k_x1, (B1, D_IN), jnp.float32)
    out1 = jax.block_until_ready(domain_cl_forward(x1, packed))
    ref1 = reference_forward(x1, params)
    assert out1.shape == (B1, 1), out1.shape
    # bf16 weights/activations with f32 accumulation: loose tolerance vs f32 ref.
    assert jnp.allclose(out1, ref1, atol=2e-2, rtol=2e-2), "mismatch (single tile)"
    assert bool(jnp.all((out1 >= 0.0) & (out1 <= 1.0))), "sigmoid range violated"

    # Slightly larger batch: exercises the multi-tile (>=2 grid steps) path
    # used to feed both TensorCores on v7x, plus the padded-tail correctness.
    B2 = 40
    x2 = jax.random.normal(k_x2, (B2, D_IN), jnp.float32)
    out2 = jax.block_until_ready(domain_cl_forward(x2, packed))
    ref2 = reference_forward(x2, params)
    assert out2.shape == (B2, 1), out2.shape
    assert jnp.allclose(out2, ref2, atol=2e-2, rtol=2e-2), "mismatch (multi tile)"
    assert bool(jnp.all((out2 >= 0.0) & (out2 <= 1.0))), "sigmoid range violated"

    print("KERNEL_OK")
</pallas_src>

<mosaic_0001>
module attributes {stable_mosaic.version = 11 : i64} {
  func.func @domain_cl_kernel(%arg0: i32, %arg1: memref<16x512xbf16, #tpu.memory_space<vmem>>, %arg2: memref<512x512xbf16, #tpu.memory_space<vmem>>, %arg3: memref<1x512xf32, #tpu.memory_space<vmem>>, %arg4: memref<512x512xbf16, #tpu.memory_space<vmem>>, %arg5: memref<1x512xf32, #tpu.memory_space<vmem>>, %arg6: memref<1x512xf32, #tpu.memory_space<vmem>>, %arg7: memref<1x1xf32, #tpu.memory_space<vmem>>, %arg8: memref<16x1xf32, #tpu.memory_space<vmem>>) attributes {dimension_semantics = [#tpu.dimension_semantics<parallel>], iteration_bounds = array<i64: 1>, scalar_prefetch = 0 : i64, scratch_operands = 0 : i64, tpu.core_type = #tpu.core_type<tc>, window_params = [{transform_indices = @transform_0, window_bounds = array<i64: 16, 512>}, {pipeline_mode = #tpu.pipeline_mode<synchronous>, transform_indices = @transform_1, window_bounds = array<i64: 512, 512>}, {pipeline_mode = #tpu.pipeline_mode<synchronous>, transform_indices = @transform_2, window_bounds = array<i64: 1, 512>}, {pipeline_mode = #tpu.pipeline_mode<synchronous>, transform_indices = @transform_3, window_bounds = array<i64: 512, 512>}, {pipeline_mode = #tpu.pipeline_mode<synchronous>, transform_indices = @transform_4, window_bounds = array<i64: 1, 512>}, {pipeline_mode = #tpu.pipeline_mode<synchronous>, transform_indices = @transform_5, window_bounds = array<i64: 1, 512>}, {pipeline_mode = #tpu.pipeline_mode<synchronous>, transform_indices = @transform_6, window_bounds = array<i64: 1, 1>}, {transform_indices = @transform_7, window_bounds = array<i64: 16, 1>}]} {
    %c0 = arith.constant 0 : index
    %c0_0 = arith.constant 0 : index
    %0 = vector.load %arg1[%c0, %c0_0] : memref<16x512xbf16, #tpu.memory_space<vmem>>, vector<16x512xbf16>
    %c0_1 = arith.constant 0 : index
    %c0_2 = arith.constant 0 : index
    %1 = vector.load %arg2[%c0_1, %c0_2] : memref<512x512xbf16, #tpu.memory_space<vmem>>, vector<512x512xbf16>
    %cst = arith.constant dense<0.000000e+00> : vector<16x512xf32>
    %2 = tpu.matmul %0, %1, %cst {dimension_numbers = #tpu.dot_dimension_numbers<[1], [0], [0], [1], [0, 0, 1, 1], [], []>} : vector<16x512xbf16>, vector<512x512xbf16>, vector<16x512xf32> -> vector<16x512xf32>
    %c0_3 = arith.constant 0 : index
    %c0_4 = arith.constant 0 : index
    %3 = vector.load %arg3[%c0_3, %c0_4] : memref<1x512xf32, #tpu.memory_space<vmem>>, vector<1x512xf32>
    %4 = vector.broadcast %3 : vector<1x512xf32> to vector<16x512xf32>
    %5 = arith.addf %2, %4 : vector<16x512xf32>
    %cst_5 = arith.constant 0.000000e+00 : f32
    %6 = vector.broadcast %cst_5 : f32 to vector<16x512xf32>
    %7 = arith.maximumf %5, %6 : vector<16x512xf32>
    %8 = arith.truncf %7 : vector<16x512xf32> to vector<16x512xbf16>
    %c0_6 = arith.constant 0 : index
    %c0_7 = arith.constant 0 : index
    %9 = vector.load %arg4[%c0_6, %c0_7] : memref<512x512xbf16, #tpu.memory_space<vmem>>, vector<512x512xbf16>
    %cst_8 = arith.constant dense<0.000000e+00> : vector<16x512xf32>
    %10 = tpu.matmul %8, %9, %cst_8 {dimension_numbers = #tpu.dot_dimension_numbers<[1], [0], [0], [1], [0, 0, 1, 1], [], []>} : vector<16x512xbf16>, vector<512x512xbf16>, vector<16x512xf32> -> vector<16x512xf32>
    %c0_9 = arith.constant 0 : index
    %c0_10 = arith.constant 0 : index
    %11 = vector.load %arg5[%c0_9, %c0_10] : memref<1x512xf32, #tpu.memory_space<vmem>>, vector<1x512xf32>
    %12 = vector.broadcast %11 : vector<1x512xf32> to vector<16x512xf32>
    %13 = arith.addf %10, %12 : vector<16x512xf32>
    %cst_11 = arith.constant 0.000000e+00 : f32
    %14 = vector.broadcast %cst_11 : f32 to vector<16x512xf32>
    %15 = arith.maximumf %13, %14 : vector<16x512xf32>
    %c0_12 = arith.constant 0 : index
    %c0_13 = arith.constant 0 : index
    %16 = vector.load %arg6[%c0_12, %c0_13] : memref<1x512xf32, #tpu.memory_space<vmem>>, vector<1x512xf32>
    %17 = vector.broadcast %16 : vector<1x512xf32> to vector<16x512xf32>
    %18 = arith.mulf %15, %17 : vector<16x512xf32>
    %cst_14 = arith.constant dense<0.000000e+00> : vector<16xf32>
    %19 = vector.multi_reduction <add>, %18, %cst_14 [1] : vector<16x512xf32> to vector<16xf32>
    %20 = vector.shape_cast %19 : vector<16xf32> to vector<16x1xf32>
    %c0_15 = arith.constant 0 : index
    %c0_16 = arith.constant 0 : index
    %21 = vector.load %arg7[%c0_15, %c0_16] : memref<1x1xf32, #tpu.memory_space<vmem>>, vector<1x1xf32>
    %22 = vector.broadcast %21 : vector<1x1xf32> to vector<16x1xf32>
    %23 = arith.addf %20, %22 : vector<16x1xf32>
    %24 = arith.negf %23 : vector<16x1xf32>
    %25 = math.exp %24 : vector<16x1xf32>
    %cst_17 = arith.constant 1.000000e+00 : f32
    %26 = vector.broadcast %cst_17 : f32 to vector<16x1xf32>
    %27 = arith.addf %26, %25 : vector<16x1xf32>
    %28 = arith.divf %26, %27 : vector<16x1xf32>
    %c0_18 = arith.constant 0 : index
    %c0_19 = arith.constant 0 : index
    %29 = vector.load %arg8[%c0_18, %c0_19] : memref<16x1xf32, #tpu.memory_space<vmem>>, vector<16x1xf32>
    tpu.vector_store %arg8[%c0_18, %c0_19], %28 {strides = array<i32>} : memref<16x1xf32, #tpu.memory_space<vmem>>, vector<16x1xf32>,
    return
  }
  func.func @transform_0(%arg0: i32) -> (i32, i32) {
    %c0_i32 = arith.constant 0 : i32
    %c0_i32_0 = arith.constant 0 : i32
    return %arg0, %c0_i32 : i32, i32
  }
  func.func @transform_1(%arg0: i32) -> (i32, i32) {
    %c0_i32 = arith.constant 0 : i32
    %c0_i32_0 = arith.constant 0 : i32
    %c0_i32_1 = arith.constant 0 : i32
    return %c0_i32, %c0_i32_0 : i32, i32
  }
  func.func @transform_2(%arg0: i32) -> (i32, i32) {
    %c0_i32 = arith.constant 0 : i32
    %c0_i32_0 = arith.constant 0 : i32
    %c0_i32_1 = arith.constant 0 : i32
    return %c0_i32, %c0_i32_0 : i32, i32
  }
  func.func @transform_3(%arg0: i32) -> (i32, i32) {
    %c0_i32 = arith.constant 0 : i32
    %c0_i32_0 = arith.constant 0 : i32
    %c0_i32_1 = arith.constant 0 : i32
    return %c0_i32, %c0_i32_0 : i32, i32
  }
  func.func @transform_4(%arg0: i32) -> (i32, i32) {
    %c0_i32 = arith.constant 0 : i32
    %c0_i32_0 = arith.constant 0 : i32
    %c0_i32_1 = arith.constant 0 : i32
    return %c0_i32, %c0_i32_0 : i32, i32
  }
  func.func @transform_5(%arg0: i32) -> (i32, i32) {
    %c0_i32 = arith.constant 0 : i32
    %c0_i32_0 = arith.constant 0 : i32
    %c0_i32_1 = arith.constant 0 : i32
    return %c0_i32, %c0_i32_0 : i32, i32
  }
  func.func @transform_6(%arg0: i32) -> (i32, i32) {
    %c0_i32 = arith.constant 0 : i32
    %c0_i32_0 = arith.constant 0 : i32
    %c0_i32_1 = arith.constant 0 : i32
    return %c0_i32, %c0_i32_0 : i32, i32
  }
  func.func @transform_7(%arg0: i32) -> (i32, i32) {
    %c0_i32 = arith.constant 0 : i32
    %c0_i32_0 = arith.constant 0 : i32
    return %arg0, %c0_i32 : i32, i32
  }
}

</mosaic_0001>

<llo_original>
// kernel: domain_cl_forward.1
$region0: #{domain_cl_forward.1}
  #allocation0 [shape = 'u32[]', space=smem, size = 0x4, offset = 0x4, fixed_abs, tag = 'smem constant byte address 0x4 - core index']
  #allocation1 [shape = 'u32[144,128]{1,0:T(1,128)}', space=vmem, size = 0x12000, scoped, tag = 'internal scratch']
  #allocation2 [shape = 'f32[1,1]{1,0:T(1,128)S(1)}', space=vmem, size = 0x200, scoped, tag = 'scoped memory for domain_cl_forward.1']
  %s0 = inlined_call_operand.vmem [shape: bf16[16,512], index: 0, kind: input, shape index: {}]
  %s1 = inlined_call_operand.hbm [shape: bf16[512,512], index: 1, kind: input, shape index: {}]
  %s2 = inlined_call_operand.vmem [shape: f32[1,512], index: 2, kind: input, shape index: {}]
  %s3 = inlined_call_operand.hbm [shape: bf16[512,512], index: 3, kind: input, shape index: {}]
  %s4 = inlined_call_operand.vmem [shape: f32[1,512], index: 4, kind: input, shape index: {}]
  %s5 = inlined_call_operand.vmem [shape: f32[1,512], index: 5, kind: input, shape index: {}]
  %s6 = inlined_call_operand.<no memory space> [shape: f32[1,1], index: 6, kind: input, shape index: {}]
  %s7 = inlined_call_operand.vmem [shape: f32[16,1], index: 7, kind: output, shape index: {}]
  %s8 = sld [smem:[#allocation0]]
  $region46: #{domain_cl_forward.1} parent=0
    _
  %s10 = ssub.s32 1, %s8
  %s11 = scalar_select 0, %s10, %s8
  %v12 = vstv %s6
  %13 = vst [vmem:[#allocation2] sm:$0x1] %v12
  $region1: #{domain_cl_forward.1} parent=0
    #allocation3 [shape = 'u8[524288]{0}', space=vmem, size = 0x80000, scoped, tag = 'input window, operand 1, single buffered']
    #allocation4 [shape = 's32[1]{0}', space=sflag, size = 0x4, scoped, tag = 'scoped memory for domain_cl_forward.1']
    #allocation5 [shape = 'u8[524288]{0}', space=vmem, size = 0x80000, scoped, tag = 'input window, operand 3, single buffered']
    #allocation6 [shape = 's32[1]{0}', space=sflag, size = 0x4, scoped, tag = 'scoped memory for domain_cl_forward.1']
    %14 = vsyncpa [#allocation4], 0
    %15 = vsyncpa [#allocation6], 0
    // Predicated region
    $region2: #{domain_cl_forward.1} parent=1 // pred_check
      _
    $region3: #{domain_cl_forward.1} parent=1 // pred_check_branch
      %17 = sbr.rel (0) target = $region5
    $region4: #{domain_cl_forward.1} parent=1 // pred_region
      _
    $region5: #{domain_cl_forward.1} parent=1 // pred_fallthru
      _
    // Predicated region
    $region6: #{domain_cl_forward.1} parent=1 // pred_check
      _
    $region7: #{domain_cl_forward.1} parent=1 // pred_check_branch
      %19 = sbr.rel (0) target = $region9
    $region8: #{domain_cl_forward.1} parent=1 // pred_region
      %s21 = ssub.s32 16384, 16384
      %22 = vsyncadd [#allocation4], %s21
      %s23 = sshll.u32 [#allocation3], 4
      %s24 = int_to_ptr.vmem [resolvable:$true] %s23
      %29 = dma.hbm_to_vmem [thread:$0]  %s1, 16384, %s24, [#allocation4], 256, 256, 16
    $region9: #{domain_cl_forward.1} parent=1 // pred_fallthru
      _
    // Predicated region
    $region10: #{domain_cl_forward.1} parent=1 // pred_check
      _
    $region11: #{domain_cl_forward.1} parent=1 // pred_check_branch
      %31 = sbr.rel (0) target = $region13
    $region12: #{domain_cl_forward.1} parent=1 // pred_region
      _
    $region13: #{domain_cl_forward.1} parent=1 // pred_fallthru
      _
    // Predicated region
    $region14: #{domain_cl_forward.1} parent=1 // pred_check
      _
    $region15: #{domain_cl_forward.1} parent=1 // pred_check_branch
      %33 = sbr.rel (0) target = $region17
    $region16: #{domain_cl_forward.1} parent=1 // pred_region
      %s35 = ssub.s32 16384, 16384
      %36 = vsyncadd [#allocation6], %s35
      %s37 = sshll.u32 [#allocation5], 4
      %s38 = int_to_ptr.vmem [resolvable:$true] %s37
      %43 = dma.hbm_to_vmem [thread:$0]  %s3, 16384, %s38, [#allocation6], 256, 256, 16
    $region17: #{domain_cl_forward.1} parent=1 // pred_fallthru
      _
    // Predicated region
    $region18: #{domain_cl_forward.1} parent=1 // pred_check
      _
    $region19: #{domain_cl_forward.1} parent=1 // pred_check_branch
      %45 = sbr.rel (0) target = $region21
    $region20: #{domain_cl_forward.1} parent=1 // pred_region
      _
    $region21: #{domain_cl_forward.1} parent=1 // pred_fallthru
      _
    // Predicated region
    $region22: #{domain_cl_forward.1} parent=1 // pred_check
      _
    $region23: #{domain_cl_forward.1} parent=1 // pred_check_branch
      %47 = sbr.rel (0) target = $region25
    $region24: #{domain_cl_forward.1} parent=1 // pred_region
      _
    $region25: #{domain_cl_forward.1} parent=1 // pred_fallthru
      _
    // Predicated region
    $region26: #{domain_cl_forward.1} parent=1 // pred_check
      _
    $region27: #{domain_cl_forward.1} parent=1 // pred_check_branch
      %49 = sbr.rel (0) target = $region29
    $region28: #{domain_cl_forward.1} parent=1 // pred_region
      _
    $region29: #{domain_cl_forward.1} parent=1 // pred_fallthru
      _
    // Predicated region
    $region30: #{domain_cl_forward.1} parent=1 // pred_check
      _
    $region31: #{domain_cl_forward.1} parent=1 // pred_check_branch
      %51 = sbr.rel (0) target = $region33
    $region32: #{domain_cl_forward.1} parent=1 // pred_region
      %52 = dma.done [#allocation4], 16384
    $region33: #{domain_cl_forward.1} parent=1 // pred_fallthru
      _
    // Predicated region
    $region34: #{domain_cl_forward.1} parent=1 // pred_check
      _
    $region35: #{domain_cl_forward.1} parent=1 // pred_check_branch
      %54 = sbr.rel (0) target = $region37
    $region36: #{domain_cl_forward.1} parent=1 // pred_region
      %55 = dma.done [#allocation6], 16384
    $region37: #{domain_cl_forward.1} parent=1 // pred_fallthru
      _
    %v56 = vld [vmem:[%s0] sm:$0xff]
    %v57 = vld [vmem:[%s0 + $0x8] sm:$0xff]
    %v58 = vld [vmem:[%s0 + $0x10] sm:$0xff]
    %v59 = vld [vmem:[%s0 + $0x18] sm:$0xff]
    %v60 = vld [vmem:[#allocation3] sm:$0xff]
    %v61 = vld [vmem:[#allocation3 + $0x8] sm:$0xff]
    %v62 = vld [vmem:[#allocation3 + $0x10] sm:$0xff]
    %v63 = vld [vmem:[#allocation3 + $0x18] sm:$0xff]
    %v64 = vld [vmem:[#allocation3 + $0x20] sm:$0xff]
    %v65 = vld [vmem:[#allocation3 + $0x28] sm:$0xff]
    %v66 = vld [vmem:[#allocation3 + $0x30] sm:$0xff]
    %v67 = vld [vmem:[#allocation3 + $0x38] sm:$0xff]
    %v68 = vld [vmem:[#allocation3 + $0x40] sm:$0xff]
    %v69 = vld [vmem:[#allocation3 + $0x48] sm:$0xff]
    %v70 = vld [vmem:[#allocation3 + $0x50] sm:$0xff]
    %v71 = vld [vmem:[#allocation3 + $0x58] sm:$0xff]
    %v72 = vld [vmem:[#allocation3 + $0x60] sm:$0xff]
    %v73 = vld [vmem:[#allocation3 + $0x68] sm:$0xff]
    %v74 = vld [vmem:[#allocation3 + $0x70] sm:$0xff]
    %v75 = vld [vmem:[#allocation3 + $0x78] sm:$0xff]
    %v76 = vld [vmem:[#allocation3 + $0x80] sm:$0xff]
    %v77 = vld [vmem:[#allocation3 + $0x88] sm:$0xff]
    %v78 = vld [vmem:[#allocation3 + $0x90] sm:$0xff]
    %v79 = vld [vmem:[#allocation3 + $0x98] sm:$0xff]
    %v80 = vld [vmem:[#allocation3 + $0xa0] sm:$0xff]
    %v81 = vld [vmem:[#allocation3 + $0xa8] sm:$0xff]
    %v82 = vld [vmem:[#allocation3 + $0xb0] sm:$0xff]
    %v83 = vld [vmem:[#allocation3 + $0xb8] sm:$0xff]
    %v84 = vld [vmem:[#allocation3 + $0xc0] sm:$0xff]
    %v85 = vld [vmem:[#allocation3 + $0xc8] sm:$0xff]
    %v86 = vld [vmem:[#allocation3 + $0xd0] sm:$0xff]
    %v87 = vld [vmem:[#allocation3 + $0xd8] sm:$0xff]
    %v88 = vld [vmem:[#allocation3 + $0xe0] sm:$0xff]
    %v89 = vld [vmem:[#allocation3 + $0xe8] sm:$0xff]
    %v90 = vld [vmem:[#allocation3 + $0xf0] sm:$0xff]
    %v91 = vld [vmem:[#allocation3 + $0xf8] sm:$0xff]
    %v92 = vld [vmem:[#allocation3 + $0x100] sm:$0xff]
    %v93 = vld [vmem:[#allocation3 + $0x108] sm:$0xff]
    %v94 = vld [vmem:[#allocation3 + $0x110] sm:$0xff]
    %v95 = vld [vmem:[#allocation3 + $0x118] sm:$0xff]
    %v96 = vld [vmem:[#allocation3 + $0x120] sm:$0xff]
    %v97 = vld [vmem:[#allocation3 + $0x128] sm:$0xff]
    %v98 = vld [vmem:[#allocation3 + $0x130] sm:$0xff]
    %v99 = vld [vmem:[#allocation3 + $0x138] sm:$0xff]
    %v100 = vld [vmem:[#allocation3 + $0x140] sm:$0xff]
    %v101 = vld [vmem:[#allocation3 + $0x148] sm:$0xff]
    %v102 = vld [vmem:[#allocation3 + $0x150] sm:$0xff]
    %v103 = vld [vmem:[#allocation3 + $0x158] sm:$0xff]
    %v104 = vld [vmem:[#allocation3 + $0x160] sm:$0xff]
    %v105 = vld [vmem:[#allocation3 + $0x168] sm:$0xff]
    %v106 = vld [vmem:[#allocation3 + $0x170] sm:$0xff]
    %v107 = vld [vmem:[#allocation3 + $0x178] sm:$0xff]
    %v108 = vld [vmem:[#allocation3 + $0x180] sm:$0xff]
    %v109 = vld [vmem:[#allocation3 + $0x188] sm:$0xff]
    %v110 = vld [vmem:[#allocation3 + $0x190] sm:$0xff]
    %v111 = vld [vmem:[#allocation3 + $0x198] sm:$0xff]
    %v112 = vld [vmem:[#allocation3 + $0x1a0] sm:$0xff]
    %v113 = vld [vmem:[#allocation3 + $0x1a8] sm:$0xff]
    %v114 = vld [vmem:[#allocation3 + $0x1b0] sm:$0xff]
    %v115 = vld [vmem:[#allocation3 + $0x1b8] sm:$0xff]
    %v116 = vld [vmem:[#allocation3 + $0x1c0] sm:$0xff]
    %v117 = vld [vmem:[#allocation3 + $0x1c8] sm:$0xff]
    %v118 = vld [vmem:[#allocation3 + $0x1d0] sm:$0xff]
    %v119 = vld [vmem:[#allocation3 + $0x1d8] sm:$0xff]
    %v120 = vld [vmem:[#allocation3 + $0x1e0] sm:$0xff]
    %v121 = vld [vmem:[#allocation3 + $0x1e8] sm:$0xff]
    %v122 = vld [vmem:[#allocation3 + $0x1f0] sm:$0xff]
    %v123 = vld [vmem:[#allocation3 + $0x1f8] sm:$0xff]
    %v124 = vld [vmem:[#allocation3 + $0x200] sm:$0xff]
    %v125 = vld [vmem:[#allocation3 + $0x208] sm:$0xff]
    %v126 = vld [vmem:[#allocation3 + $0x210] sm:$0xff]
    %v127 = vld [vmem:[#allocation3 + $0x218] sm:$0xff]
    %v128 = vld [vmem:[#allocation3 + $0x220] sm:$0xff]
    %v129 = vld [vmem:[#allocation3 + $0x228] sm:$0xff]
    %v130 = vld [vmem:[#allocation3 + $0x230] sm:$0xff]
    %v131 = vld [vmem:[#allocation3 + $0x238] sm:$0xff]
    %v132 = vld [vmem:[#allocation3 + $0x240] sm:$0xff]
    %v133 = vld [vmem:[#allocation3 + $0x248] sm:$0xff]
    %v134 = vld [vmem:[#allocation3 + $0x250] sm:$0xff]
    %v135 = vld [vmem:[#allocation3 + $0x258] sm:$0xff]
    %v136 = vld [vmem:[#allocation3 + $0x260] sm:$0xff]
    %v137 = vld [vmem:[#allocation3 + $0x268] sm:$0xff]
    %v138 = vld [vmem:[#allocation3 + $0x270] sm:$0xff]
    %v139 = vld [vmem:[#allocation3 + $0x278] sm:$0xff]
    %v140 = vld [vmem:[#allocation3 + $0x280] sm:$0xff]
    %v141 = vld [vmem:[#allocation3 + $0x288] sm:$0xff]
    %v142 = vld [vmem:[#allocation3 + $0x290] sm:$0xff]
    %v143 = vld [vmem:[#allocation3 + $0x298] sm:$0xff]
    %v144 = vld [vmem:[#allocation3 + $0x2a0] sm:$0xff]
    %v145 = vld [vmem:[#allocation3 + $0x2a8] sm:$0xff]
    %v146 = vld [vmem:[#allocation3 + $0x2b0] sm:$0xff]
    %v147 = vld [vmem:[#allocation3 + $0x2b8] sm:$0xff]
    %v148 = vld [vmem:[#allocation3 + $0x2c0] sm:$0xff]
    %v149 = vld [vmem:[#allocation3 + $0x2c8] sm:$0xff]
    %v150 = vld [vmem:[#allocation3 + $0x2d0] sm:$0xff]
    %v151 = vld [vmem:[#allocation3 + $0x2d8] sm:$0xff]
    %v152 = vld [vmem:[#allocation3 + $0x2e0] sm:$0xff]
    %v153 = vld [vmem:[#allocation3 + $0x2e8] sm:$0xff]
    %v154 = vld [vmem:[#allocation3 + $0x2f0] sm:$0xff]
    %v155 = vld [vmem:[#allocation3 + $0x2f8] sm:$0xff]
    %v156 = vld [vmem:[#allocation3 + $0x300] sm:$0xff]
    %v157 = vld [vmem:[#allocation3 + $0x308] sm:$0xff]
    %v158 = vld [vmem:[#allocation3 + $0x310] sm:$0xff]
    %v159 = vld [vmem:[#allocation3 + $0x318] sm:$0xff]
    %v160 = vld [vmem:[#allocation3 + $0x320] sm:$0xff]
    %v161 = vld [vmem:[#allocation3 + $0x328] sm:$0xff]
    %v162 = vld [vmem:[#allocation3 + $0x330] sm:$0xff]
    %v163 = vld [vmem:[#allocation3 + $0x338] sm:$0xff]
    %v164 = vld [vmem:[#allocation3 + $0x340] sm:$0xff]
    %v165 = vld [vmem:[#allocation3 + $0x348] sm:$0xff]
    %v166 = vld [vmem:[#allocation3 + $0x350] sm:$0xff]
    %v167 = vld [vmem:[#allocation3 + $0x358] sm:$0xff]
    %v168 = vld [vmem:[#allocation3 + $0x360] sm:$0xff]
    %v169 = vld [vmem:[#allocation3 + $0x368] sm:$0xff]
    %v170 = vld [vmem:[#allocation3 + $0x370] sm:$0xff]
    %v171 = vld [vmem:[#allocation3 + $0x378] sm:$0xff]
    %v172 = vld [vmem:[#allocation3 + $0x380] sm:$0xff]
    %v173 = vld [vmem:[#allocation3 + $0x388] sm:$0xff]
    %v174 = vld [vmem:[#allocation3 + $0x390] sm:$0xff]
    %v175 = vld [vmem:[#allocation3 + $0x398] sm:$0xff]
    %v176 = vld [vmem:[#allocation3 + $0x3a0] sm:$0xff]
    %v177 = vld [vmem:[#allocation3 + $0x3a8] sm:$0xff]
    %v178 = vld [vmem:[#allocation3 + $0x3b0] sm:$0xff]
    %v179 = vld [vmem:[#allocation3 + $0x3b8] sm:$0xff]
    %v180 = vld [vmem:[#allocation3 + $0x3c0] sm:$0xff]
    %v181 = vld [vmem:[#allocation3 + $0x3c8] sm:$0xff]
    %v182 = vld [vmem:[#allocation3 + $0x3d0] sm:$0xff]
    %v183 = vld [vmem:[#allocation3 + $0x3d8] sm:$0xff]
    %v184 = vld [vmem:[#allocation3 + $0x3e0] sm:$0xff]
    %v185 = vld [vmem:[#allocation3 + $0x3e8] sm:$0xff]
    %v186 = vld [vmem:[#allocation3 + $0x3f0] sm:$0xff]
    %v187 = vld [vmem:[#allocation3 + $0x3f8] sm:$0xff]
    %v188 = vld [vmem:[%s2] sm:$0xf]
    %v190 = vlaneseq
    %v191 = vshrl.u32 %v190, 7
    %v192 = vsub.s32 0, %v191
    %v193 = vrot.slane %v188, %v192
    %v194 = vlaneseq
    %v195 = vshrl.u32 %v194, 7
    %v196 = vsub.s32 1, %v195
    %v197 = vrot.slane %v188, %v196
    %v198 = vlaneseq
    %v199 = vshrl.u32 %v198, 7
    %v200 = vsub.s32 2, %v199
    %v201 = vrot.slane %v188, %v200
    %v202 = vlaneseq
    %v203 = vshrl.u32 %v202, 7
    %v204 = vsub.s32 3, %v203
    %v205 = vrot.slane %v188, %v204
    %v214 = vunpack.c.l.b16 %v56
    %v215 = vunpack.c.h.b16 %v56
    %v216 = vunpack.c.l.b16 %v57
    %v217 = vunpack.c.h.b16 %v57
    %v218 = vunpack.c.l.b16 %v58
    %v219 = vunpack.c.h.b16 %v58
    %v220 = vunpack.c.l.b16 %v59
    %v221 = vunpack.c.h.b16 %v59
    %v222 = vpack.c.b16 %v218, %v214
    %v223 = vpack.c.b16 %v219, %v215
    %v224 = vpack.c.b16 %v220, %v216
    %v225 = vpack.c.b16 %v221, %v217
    %v358 = vunpack.c.l.b16 %v60
    %v359 = vunpack.c.h.b16 %v60
    %v360 = vunpack.c.l.b16 %v61
    %v361 = vunpack.c.h.b16 %v61
    %v362 = vunpack.c.l.b16 %v62
    %v363 = vunpack.c.h.b16 %v62
    %v364 = vunpack.c.l.b16 %v63
    %v365 = vunpack.c.h.b16 %v63
    %v366 = vunpack.c.l.b16 %v64
    %v367 = vunpack.c.h.b16 %v64
    %v368 = vunpack.c.l.b16 %v65
    %v369 = vunpack.c.h.b16 %v65
    %v370 = vunpack.c.l.b16 %v66
    %v371 = vunpack.c.h.b16 %v66
    %v372 = vunpack.c.l.b16 %v67
    %v373 = vunpack.c.h.b16 %v67
    %v374 = vunpack.c.l.b16 %v68
    %v375 = vunpack.c.h.b16 %v68
    %v376 = vunpack.c.l.b16 %v69
    %v377 = vunpack.c.h.b16 %v69
    %v378 = vunpack.c.l.b16 %v70
    %v379 = vunpack.c.h.b16 %v70
    %v380 = vunpack.c.l.b16 %v71
    %v381 = vunpack.c.h.b16 %v71
    %v382 = vunpack.c.l.b16 %v72
    %v383 = vunpack.c.h.b16 %v72
    %v384 = vunpack.c.l.b16 %v73
    %v385 = vunpack.c.h.b16 %v73
    %v386 = vunpack.c.l.b16 %v74
    %v387 = vunpack.c.h.b16 %v74
    %v388 = vunpack.c.l.b16 %v75
    %v389 = vunpack.c.h.b16 %v75
    %v390 = vunpack.c.l.b16 %v76
    %v391 = vunpack.c.h.b16 %v76
    %v392 = vunpack.c.l.b16 %v77
    %v393 = vunpack.c.h.b16 %v77
    %v394 = vunpack.c.l.b16 %v78
    %v395 = vunpack.c.h.b16 %v78
    %v396 = vunpack.c.l.b16 %v79
    %v397 = vunpack.c.h.b16 %v79
    %v398 = vunpack.c.l.b16 %v80
    %v399 = vunpack.c.h.b16 %v80
    %v400 = vunpack.c.l.b16 %v81
    %v401 = vunpack.c.h.b16 %v81
    %v402 = vunpack.c.l.b16 %v82
    %v403 = vunpack.c.h.b16 %v82
    %v404 = vunpack.c.l.b16 %v83
    %v405 = vunpack.c.h.b16 %v83
    %v406 = vunpack.c.l.b16 %v84
    %v407 = vunpack.c.h.b16 %v84
    %v408 = vunpack.c.l.b16 %v85
    %v409 = vunpack.c.h.b16 %v85
    %v410 = vunpack.c.l.b16 %v86
    %v411 = vunpack.c.h.b16 %v86
    %v412 = vunpack.c.l.b16 %v87
    %v413 = vunpack.c.h.b16 %v87
    %v414 = vunpack.c.l.b16 %v88
    %v415 = vunpack.c.h.b16 %v88
    %v416 = vunpack.c.l.b16 %v89
    %v417 = vunpack.c.h.b16 %v89
    %v418 = vunpack.c.l.b16 %v90
    %v419 = vunpack.c.h.b16 %v90
    %v420 = vunpack.c.l.b16 %v91
    %v421 = vunpack.c.h.b16 %v91
    %v422 = vunpack.c.l.b16 %v92
    %v423 = vunpack.c.h.b16 %v92
    %v424 = vunpack.c.l.b16 %v93
    %v425 = vunpack.c.h.b16 %v93
    %v426 = vunpack.c.l.b16 %v94
    %v427 = vunpack.c.h.b16 %v94
    %v428 = vunpack.c.l.b16 %v95
    %v429 = vunpack.c.h.b16 %v95
    %v430 = vunpack.c.l.b16 %v96
    %v431 = vunpack.c.h.b16 %v96
    %v432 = vunpack.c.l.b16 %v97
    %v433 = vunpack.c.h.b16 %v97
    %v434 = vunpack.c.l.b16 %v98
    %v435 = vunpack.c.h.b16 %v98
    %v436 = vunpack.c.l.b16 %v99
    %v437 = vunpack.c.h.b16 %v99
    %v438 = vunpack.c.l.b16 %v100
    %v439 = vunpack.c.h.b16 %v100
    %v440 = vunpack.c.l.b16 %v101
    %v441 = vunpack.c.h.b16 %v101
    %v442 = vunpack.c.l.b16 %v102
    %v443 = vunpack.c.h.b16 %v102
    %v444 = vunpack.c.l.b16 %v103
    %v445 = vunpack.c.h.b16 %v103
    %v446 = vunpack.c.l.b16 %v104
    %v447 = vunpack.c.h.b16 %v104
    %v448 = vunpack.c.l.b16 %v105
    %v449 = vunpack.c.h.b16 %v105
    %v450 = vunpack.c.l.b16 %v106
    %v451 = vunpack.c.h.b16 %v106
    %v452 = vunpack.c.l.b16 %v107
    %v453 = vunpack.c.h.b16 %v107
    %v454 = vunpack.c.l.b16 %v108
    %v455 = vunpack.c.h.b16 %v108
    %v456 = vunpack.c.l.b16 %v109
    %v457 = vunpack.c.h.b16 %v109
    %v458 = vunpack.c.l.b16 %v110
    %v459 = vunpack.c.h.b16 %v110
    %v460 = vunpack.c.l.b16 %v111
    %v461 = vunpack.c.h.b16 %v111
    %v462 = vunpack.c.l.b16 %v112
    %v463 = vunpack.c.h.b16 %v112
    %v464 = vunpack.c.l.b16 %v113
    %v465 = vunpack.c.h.b16 %v113
    %v466 = vunpack.c.l.b16 %v114
    %v467 = vunpack.c.h.b16 %v114
    %v468 = vunpack.c.l.b16 %v115
    %v469 = vunpack.c.h.b16 %v115
    %v470 = vunpack.c.l.b16 %v116
    %v471 = vunpack.c.h.b16 %v116
    %v472 = vunpack.c.l.b16 %v117
    %v473 = vunpack.c.h.b16 %v117
    %v474 = vunpack.c.l.b16 %v118
    %v475 = vunpack.c.h.b16 %v118
    %v476 = vunpack.c.l.b16 %v119
    %v477 = vunpack.c.h.b16 %v119
    %v478 = vunpack.c.l.b16 %v120
    %v479 = vunpack.c.h.b16 %v120
    %v480 = vunpack.c.l.b16 %v121
    %v481 = vunpack.c.h.b16 %v121
    %v482 = vunpack.c.l.b16 %v122
    %v483 = vunpack.c.h.b16 %v122
    %v484 = vunpack.c.l.b16 %v123
    %v485 = vunpack.c.h.b16 %v123
    %v486 = vunpack.c.l.b16 %v124
    %v487 = vunpack.c.h.b16 %v124
    %v488 = vunpack.c.l.b16 %v125
    %v489 = vunpack.c.h.b16 %v125
    %v490 = vunpack.c.l.b16 %v126
    %v491 = vunpack.c.h.b16 %v126
    %v492 = vunpack.c.l.b16 %v127
    %v493 = vunpack.c.h.b16 %v127
    %v494 = vunpack.c.l.b16 %v128
    %v495 = vunpack.c.h.b16 %v128
    %v496 = vunpack.c.l.b16 %v129
    %v497 = vunpack.c.h.b16 %v129
    %v498 = vunpack.c.l.b16 %v130
    %v499 = vunpack.c.h.b16 %v130
    %v500 = vunpack.c.l.b16 %v131
    %v501 = vunpack.c.h.b16 %v131
    %v502 = vunpack.c.l.b16 %v132
    %v503 = vunpack.c.h.b16 %v132
    %v504 = vunpack.c.l.b16 %v133
    %v505 = vunpack.c.h.b16 %v133
    %v506 = vunpack.c.l.b16 %v134
    %v507 = vunpack.c.h.b16 %v134
    %v508 = vunpack.c.l.b16 %v135
    %v509 = vunpack.c.h.b16 %v135
    %v510 = vunpack.c.l.b16 %v136
    %v511 = vunpack.c.h.b16 %v136
    %v512 = vunpack.c.l.b16 %v137
    %v513 = vunpack.c.h.b16 %v137
    %v514 = vunpack.c.l.b16 %v138
    %v515 = vunpack.c.h.b16 %v138
    %v516 = vunpack.c.l.b16 %v139
    %v517 = vunpack.c.h.b16 %v139
    %v518 = vunpack.c.l.b16 %v140
    %v519 = vunpack.c.h.b16 %v140
    %v520 = vunpack.c.l.b16 %v141
    %v521 = vunpack.c.h.b16 %v141
    %v522 = vunpack.c.l.b16 %v142
    %v523 = vunpack.c.h.b16 %v142
    %v524 = vunpack.c.l.b16 %v143
    %v525 = vunpack.c.h.b16 %v143
    %v526 = vunpack.c.l.b16 %v144
    %v527 = vunpack.c.h.b16 %v144
    %v528 = vunpack.c.l.b16 %v145
    %v529 = vunpack.c.h.b16 %v145
    %v530 = vunpack.c.l.b16 %v146
    %v531 = vunpack.c.h.b16 %v146
    %v532 = vunpack.c.l.b16 %v147
    %v533 = vunpack.c.h.b16 %v147
    %v534 = vunpack.c.l.b16 %v148
    %v535 = vunpack.c.h.b16 %v148
    %v536 = vunpack.c.l.b16 %v149
    %v537 = vunpack.c.h.b16 %v149
    %v538 = vunpack.c.l.b16 %v150
    %v539 = vunpack.c.h.b16 %v150
    %v540 = vunpack.c.l.b16 %v151
    %v541 = vunpack.c.h.b16 %v151
    %v542 = vunpack.c.l.b16 %v152
    %v543 = vunpack.c.h.b16 %v152
    %v544 = vunpack.c.l.b16 %v153
    %v545 = vunpack.c.h.b16 %v153
    %v546 = vunpack.c.l.b16 %v154
    %v547 = vunpack.c.h.b16 %v154
    %v548 = vunpack.c.l.b16 %v155
    %v549 = vunpack.c.h.b16 %v155
    %v550 = vunpack.c.l.b16 %v156
    %v551 = vunpack.c.h.b16 %v156
    %v552 = vunpack.c.l.b16 %v157
    %v553 = vunpack.c.h.b16 %v157
    %v554 = vunpack.c.l.b16 %v158
    %v555 = vunpack.c.h.b16 %v158
    %v556 = vunpack.c.l.b16 %v159
    %v557 = vunpack.c.h.b16 %v159
    %v558 = vunpack.c.l.b16 %v160
    %v559 = vunpack.c.h.b16 %v160
    %v560 = vunpack.c.l.b16 %v161
    %v561 = vunpack.c.h.b16 %v161
    %v562 = vunpack.c.l.b16 %v162
    %v563 = vunpack.c.h.b16 %v162
    %v564 = vunpack.c.l.b16 %v163
    %v565 = vunpack.c.h.b16 %v163
    %v566 = vunpack.c.l.b16 %v164
    %v567 = vunpack.c.h.b16 %v164
    %v568 = vunpack.c.l.b16 %v165
    %v569 = vunpack.c.h.b16 %v165
    %v570 = vunpack.c.l.b16 %v166
    %v571 = vunpack.c.h.b16 %v166
    %v572 = vunpack.c.l.b16 %v167
    %v573 = vunpack.c.h.b16 %v167
    %v574 = vunpack.c.l.b16 %v168
    %v575 = vunpack.c.h.b16 %v168
    %v576 = vunpack.c.l.b16 %v169
    %v577 = vunpack.c.h.b16 %v169
    %v578 = vunpack.c.l.b16 %v170
    %v579 = vunpack.c.h.b16 %v170
    %v580 = vunpack.c.l.b16 %v171
    %v581 = vunpack.c.h.b16 %v171
    %v582 = vunpack.c.l.b16 %v172
    %v583 = vunpack.c.h.b16 %v172
    %v584 = vunpack.c.l.b16 %v173
    %v585 = vunpack.c.h.b16 %v173
    %v586 = vunpack.c.l.b16 %v174
    %v587 = vunpack.c.h.b16 %v174
    %v588 = vunpack.c.l.b16 %v175
    %v589 = vunpack.c.h.b16 %v175
    %v590 = vunpack.c.l.b16 %v176
    %v591 = vunpack.c.h.b16 %v176
    %v592 = vunpack.c.l.b16 %v177
    %v593 = vunpack.c.h.b16 %v177
    %v594 = vunpack.c.l.b16 %v178
    %v595 = vunpack.c.h.b16 %v178
    %v596 = vunpack.c.l.b16 %v179
    %v597 = vunpack.c.h.b16 %v179
    %v598 = vunpack.c.l.b16 %v180
    %v599 = vunpack.c.h.b16 %v180
    %v600 = vunpack.c.l.b16 %v181
    %v601 = vunpack.c.h.b16 %v181
    %v602 = vunpack.c.l.b16 %v182
    %v603 = vunpack.c.h.b16 %v182
    %v604 = vunpack.c.l.b16 %v183
    %v605 = vunpack.c.h.b16 %v183
    %v606 = vunpack.c.l.b16 %v184
    %v607 = vunpack.c.h.b16 %v184
    %v608 = vunpack.c.l.b16 %v185
    %v609 = vunpack.c.h.b16 %v185
    %v610 = vunpack.c.l.b16 %v186
    %v611 = vunpack.c.h.b16 %v186
    %v612 = vunpack.c.l.b16 %v187
    %v613 = vunpack.c.h.b16 %v187
    %v614 = vpack.c.b16 %v362, %v358
    %v615 = vpack.c.b16 %v363, %v359
    %v616 = vpack.c.b16 %v364, %v360
    %v617 = vpack.c.b16 %v365, %v361
    %v618 = vpack.c.b16 %v370, %v366
    %v619 = vpack.c.b16 %v371, %v367
    %v620 = vpack.c.b16 %v372, %v368
    %v621 = vpack.c.b16 %v373, %v369
    %v622 = vpack.c.b16 %v378, %v374
    %v623 = vpack.c.b16 %v379, %v375
    %v624 = vpack.c.b16 %v380, %v376
    %v625 = vpack.c.b16 %v381, %v377
    %v626 = vpack.c.b16 %v386, %v382
    %v627 = vpack.c.b16 %v387, %v383
    %v628 = vpack.c.b16 %v388, %v384
    %v629 = vpack.c.b16 %v389, %v385
    %v630 = vpack.c.b16 %v394, %v390
    %v631 = vpack.c.b16 %v395, %v391
    %v632 = vpack.c.b16 %v396, %v392
    %v633 = vpack.c.b16 %v397, %v393
    %v634 = vpack.c.b16 %v402, %v398
    %v635 = vpack.c.b16 %v403, %v399
    %v636 = vpack.c.b16 %v404, %v400
    %v637 = vpack.c.b16 %v405, %v401
    %v638 = vpack.c.b16 %v410, %v406
    %v639 = vpack.c.b16 %v411, %v407
    %v640 = vpack.c.b16 %v412, %v408
    %v641 = vpack.c.b16 %v413, %v409
    %v642 = vpack.c.b16 %v418, %v414
    %v643 = vpack.c.b16 %v419, %v415
    %v644 = vpack.c.b16 %v420, %v416
    %v645 = vpack.c.b16 %v421, %v417
    %v646 = vpack.c.b16 %v426, %v422
    %v647 = vpack.c.b16 %v427, %v423
    %v648 = vpack.c.b16 %v428, %v424
    %v649 = vpack.c.b16 %v429, %v425
    %v650 = vpack.c.b16 %v434, %v430
    %v651 = vpack.c.b16 %v435, %v431
    %v652 = vpack.c.b16 %v436, %v432
    %v653 = vpack.c.b16 %v437, %v433
    %v654 = vpack.c.b16 %v442, %v438
    %v655 = vpack.c.b16 %v443, %v439
    %v656 = vpack.c.b16 %v444, %v440
    %v657 = vpack.c.b16 %v445, %v441
    %v658 = vpack.c.b16 %v450, %v446
    %v659 = vpack.c.b16 %v451, %v447
    %v660 = vpack.c.b16 %v452, %v448
    %v661 = vpack.c.b16 %v453, %v449
    %v662 = vpack.c.b16 %v458, %v454
    %v663 = vpack.c.b16 %v459, %v455
    %v664 = vpack.c.b16 %v460, %v456
    %v665 = vpack.c.b16 %v461, %v457
    %v666 = vpack.c.b16 %v466, %v462
    %v667 = vpack.c.b16 %v467, %v463
    %v668 = vpack.c.b16 %v468, %v464
    %v669 = vpack.c.b16 %v469, %v465
    %v670 = vpack.c.b16 %v474, %v470
    %v671 = vpack.c.b16 %v475, %v471
    %v672 = vpack.c.b16 %v476, %v472
    %v673 = vpack.c.b16 %v477, %v473
    %v674 = vpack.c.b16 %v482, %v478
    %v675 = vpack.c.b16 %v483, %v479
    %v676 = vpack.c.b16 %v484, %v480
    %v677 = vpack.c.b16 %v485, %v481
    %v678 = vpack.c.b16 %v490, %v486
    %v679 = vpack.c.b16 %v491, %v487
    %v680 = vpack.c.b16 %v492, %v488
    %v681 = vpack.c.b16 %v493, %v489
    %v682 = vpack.c.b16 %v498, %v494
    %v683 = vpack.c.b16 %v499, %v495
    %v684 = vpack.c.b16 %v500, %v496
    %v685 = vpack.c.b16 %v501, %v497
    %v686 = vpack.c.b16 %v506, %v502
    %v687 = vpack.c.b16 %v507, %v503
    %v688 = vpack.c.b16 %v508, %v504
    %v689 = vpack.c.b16 %v509, %v505
    %v690 = vpack.c.b16 %v514, %v510
    %v691 = vpack.c.b16 %v515, %v511
    %v692 = vpack.c.b16 %v516, %v512
    %v693 = vpack.c.b16 %v517, %v513
    %v694 = vpack.c.b16 %v522, %v518
    %v695 = vpack.c.b16 %v523, %v519
    %v696 = vpack.c.b16 %v524, %v520
    %v697 = vpack.c.b16 %v525, %v521
    %v698 = vpack.c.b16 %v530, %v526
    %v699 = vpack.c.b16 %v531, %v527
    %v700 = vpack.c.b16 %v532, %v528
    %v701 = vpack.c.b16 %v533, %v529
    %v702 = vpack.c.b16 %v538, %v534
    %v703 = vpack.c.b16 %v539, %v535
    %v704 = vpack.c.b16 %v540, %v536
    %v705 = vpack.c.b16 %v541, %v537
    %v706 = vpack.c.b16 %v546, %v542
    %v707 = vpack.c.b16 %v547, %v543
    %v708 = vpack.c.b16 %v548, %v544
    %v709 = vpack.c.b16 %v549, %v545
    %v710 = vpack.c.b16 %v554, %v550
    %v711 = vpack.c.b16 %v555, %v551
    %v712 = vpack.c.b16 %v556, %v552
    %v713 = vpack.c.b16 %v557, %v553
    %v714 = vpack.c.b16 %v562, %v558
    %v715 = vpack.c.b16 %v563, %v559
    %v716 = vpack.c.b16 %v564, %v560
    %v717 = vpack.c.b16 %v565, %v561
    %v718 = vpack.c.b16 %v570, %v566
    %v719 = vpack.c.b16 %v571, %v567
    %v720 = vpack.c.b16 %v572, %v568
    %v721 = vpack.c.b16 %v573, %v569
    %v722 = vpack.c.b16 %v578, %v574
    %v723 = vpack.c.b16 %v579, %v575
    %v724 = vpack.c.b16 %v580, %v576
    %v725 = vpack.c.b16 %v581, %v577
    %v726 = vpack.c.b16 %v586, %v582
    %v727 = vpack.c.b16 %v587, %v583
    %v728 = vpack.c.b16 %v588, %v584
    %v729 = vpack.c.b16 %v589, %v585
    %v730 = vpack.c.b16 %v594, %v590
    %v731 = vpack.c.b16 %v595, %v591
    %v732 = vpack.c.b16 %v596, %v592
    %v733 = vpack.c.b16 %v597, %v593
    %v734 = vpack.c.b16 %v602, %v598
    %v735 = vpack.c.b16 %v603, %v599
    %v736 = vpack.c.b16 %v604, %v600
    %v737 = vpack.c.b16 %v605, %v601
    %v738 = vpack.c.b16 %v610, %v606
    %v739 = vpack.c.b16 %v611, %v607
    %v740 = vpack.c.b16 %v612, %v608
    %v741 = vpack.c.b16 %v613, %v609
    %870 = vmatprep.subr.bf16.mxu0 %v643
    %871 = vmatpush1.bf16.msra.mxu0 %v642
    %872 = vmatprep.subr.bf16.mxu0 %v639
    %873 = vmatpush1.bf16.msra.mxu0 %v638
    %874 = vmatprep.subr.bf16.mxu0 %v635
    %875 = vmatpush1.bf16.msra.mxu0 %v634
    %876 = vmatprep.subr.bf16.mxu0 %v631
    %877 = vmatpush1.bf16.msra.mxu0 %v630
    %878 = vmatprep.subr.bf16.mxu0 %v627
    %879 = vmatpush1.bf16.msra.mxu0 %v626
    %880 = vmatprep.subr.bf16.mxu0 %v623
    %881 = vmatpush1.bf16.msra.mxu0 %v622
    %882 = vmatprep.subr.bf16.mxu0 %v619
    %883 = vmatpush1.bf16.msra.mxu0 %v618
    %884 = vmatprep.subr.bf16.mxu0 %v615
    %885 = vmatpush1.bf16.msra.mxu0 %v614
    %886 = vmatprep.subr.bf16.mxu0 %v675
    %887 = vmatpush2.bf16.msra.mxu0 %v674
    %888 = vmatprep.subr.bf16.mxu0 %v671
    %889 = vmatpush2.bf16.msra.mxu0 %v670
    %890 = vmatprep.subr.bf16.mxu0 %v667
    %891 = vmatpush2.bf16.msra.mxu0 %v666
    %892 = vmatprep.subr.bf16.mxu0 %v663
    %893 = vmatpush2.bf16.msra.mxu0 %v662
    %894 = vmatprep.subr.bf16.mxu0 %v659
    %895 = vmatpush2.bf16.msra.mxu0 %v658
    %896 = vmatprep.subr.bf16.mxu0 %v655
    %897 = vmatpush2.bf16.msra.mxu0 %v654
    %898 = vmatprep.subr.bf16.mxu0 %v651
    %899 = vmatpush2.bf16.msra.mxu0 %v650
    %900 = vmatprep.subr.bf16.mxu0 %v647
    %901 = vmatpush2.bf16.msra.mxu0 %v646
    %902 = vmatprep.mubr.bf16.mxu0 %v223
    %903 = vmatmul.mubr.bf16.gmra.mxu0 %v222
    %v904 = vpop.f32.mrf.mxu0
    %v905 = vadd.f32 %v193, %v904
    %v906 = vpop.f32.mrf.mxu0
    %v907 = vadd.f32 %v197, %v906
    %v908 = vpop.f32.mrf.mxu0
    %v909 = vadd.f32 %v193, %v908
    %v910 = vpop.f32.mrf.mxu0
    %v911 = vadd.f32 %v197, %v910
    %912 = vdwg.mxu0
    %913 = vmatprep.subr.bf16.mxu0 %v707
    %914 = vmatpush1.bf16.msra.mxu0 %v706
    %915 = vmatprep.subr.bf16.mxu0 %v703
    %916 = vmatpush1.bf16.msra.mxu0 %v702
    %917 = vmatprep.subr.bf16.mxu0 %v699
    %918 = vmatpush1.bf16.msra.mxu0 %v698
    %919 = vmatprep.subr.bf16.mxu0 %v695
    %920 = vmatpush1.bf16.msra.mxu0 %v694
    %921 = vmatprep.subr.bf16.mxu0 %v691
    %922 = vmatpush1.bf16.msra.mxu0 %v690
    %923 = vmatprep.subr.bf16.mxu0 %v687
    %924 = vmatpush1.bf16.msra.mxu0 %v686
    %925 = vmatprep.subr.bf16.mxu0 %v683
    %926 = vmatpush1.bf16.msra.mxu0 %v682
    %927 = vmatprep.subr.bf16.mxu0 %v679
    %928 = vmatpush1.bf16.msra.mxu0 %v678
    %929 = vmatprep.subr.bf16.mxu0 %v739
    %930 = vmatpush2.bf16.msra.mxu0 %v738
    %931 = vmatprep.subr.bf16.mxu0 %v735
    %932 = vmatpush2.bf16.msra.mxu0 %v734
    %933 = vmatprep.subr.bf16.mxu0 %v731
    %934 = vmatpush2.bf16.msra.mxu0 %v730
    %935 = vmatprep.subr.bf16.mxu0 %v727
    %936 = vmatpush2.bf16.msra.mxu0 %v726
    %937 = vmatprep.subr.bf16.mxu0 %v723
    %938 = vmatpush2.bf16.msra.mxu0 %v722
    %939 = vmatprep.subr.bf16.mxu0 %v719
    %940 = vmatpush2.bf16.msra.mxu0 %v718
    %941 = vmatprep.subr.bf16.mxu0 %v715
    %942 = vmatpush2.bf16.msra.mxu0 %v714
    %943 = vmatprep.subr.bf16.mxu0 %v711
    %944 = vmatpush2.bf16.msra.mxu0 %v710
    %945 = vmatprep.mubr.bf16.mxu0 %v225
    %946 = vmatmul.mubr.bf16.gmra.mxu0 %v224
    %v947 = vpop.f32.mrf.mxu0
    %v948 = vadd.f32 %v905, %v947
    %v949 = vpop.f32.mrf.mxu0
    %v950 = vadd.f32 %v907, %v949
    %v951 = vpop.f32.mrf.mxu0
    %v952 = vadd.f32 %v909, %v951
    %v953 = vpop.f32.mrf.mxu0
    %v954 = vadd.f32 %v911, %v953
    %955 = vdwg.mxu0
    %956 = vmatprep.subr.bf16.mxu0 %v645
    %957 = vmatpush1.bf16.msra.mxu0 %v644
    %958 = vmatprep.subr.bf16.mxu0 %v641
    %959 = vmatpush1.bf16.msra.mxu0 %v640
    %960 = vmatprep.subr.bf16.mxu0 %v637
    %961 = vmatpush1.bf16.msra.mxu0 %v636
    %962 = vmatprep.subr.bf16.mxu0 %v633
    %963 = vmatpush1.bf16.msra.mxu0 %v632
    %964 = vmatprep.subr.bf16.mxu0 %v629
    %965 = vmatpush1.bf16.msra.mxu0 %v628
    %966 = vmatprep.subr.bf16.mxu0 %v625
    %967 = vmatpush1.bf16.msra.mxu0 %v624
    %968 = vmatprep.subr.bf16.mxu0 %v621
    %969 = vmatpush1.bf16.msra.mxu0 %v620
    %970 = vmatprep.subr.bf16.mxu0 %v617
    %971 = vmatpush1.bf16.msra.mxu0 %v616
    %972 = vmatprep.subr.bf16.mxu0 %v677
    %973 = vmatpush2.bf16.msra.mxu0 %v676
    %974 = vmatprep.subr.bf16.mxu0 %v673
    %975 = vmatpush2.bf16.msra.mxu0 %v672
    %976 = vmatprep.subr.bf16.mxu0 %v669
    %977 = vmatpush2.bf16.msra.mxu0 %v668
    %978 = vmatprep.subr.bf16.mxu0 %v665
    %979 = vmatpush2.bf16.msra.mxu0 %v664
    %980 = vmatprep.subr.bf16.mxu0 %v661
    %981 = vmatpush2.bf16.msra.mxu0 %v660
    %982 = vmatprep.subr.bf16.mxu0 %v657
    %983 = vmatpush2.bf16.msra.mxu0 %v656
    %984 = vmatprep.subr.bf16.mxu0 %v653
    %985 = vmatpush2.bf16.msra.mxu0 %v652
    %986 = vmatprep.subr.bf16.mxu0 %v649
    %987 = vmatpush2.bf16.msra.mxu0 %v648
    %988 = vmatprep.mubr.bf16.mxu0 %v223
    %989 = vmatmul.mubr.bf16.gmra.mxu0 %v222
    %v990 = vpop.f32.mrf.mxu0
    %v991 = vadd.f32 %v201, %v990
    %v992 = vpop.f32.mrf.mxu0
    %v993 = vadd.f32 %v205, %v992
    %v994 = vpop.f32.mrf.mxu0
    %v995 = vadd.f32 %v201, %v994
    %v996 = vpop.f32.mrf.mxu0
    %v997 = vadd.f32 %v205, %v996
    %998 = vdwg.mxu0
    %999 = vmatprep.subr.bf16.mxu0 %v709
    %1000 = vmatpush1.bf16.msra.mxu0 %v708
    %1001 = vmatprep.subr.bf16.mxu0 %v705
    %1002 = vmatpush1.bf16.msra.mxu0 %v704
    %1003 = vmatprep.subr.bf16.mxu0 %v701
    %1004 = vmatpush1.bf16.msra.mxu0 %v700
    %1005 = vmatprep.subr.bf16.mxu0 %v697
    %1006 = vmatpush1.bf16.msra.mxu0 %v696
    %1007 = vmatprep.subr.bf16.mxu0 %v693
    %1008 = vmatpush1.bf16.msra.mxu0 %v692
    %1009 = vmatprep.subr.bf16.mxu0 %v689
    %1010 = vmatpush1.bf16.msra.mxu0 %v688
    %1011 = vmatprep.subr.bf16.mxu0 %v685
    %1012 = vmatpush1.bf16.msra.mxu0 %v684
    %1013 = vmatprep.subr.bf16.mxu0 %v681
    %1014 = vmatpush1.bf16.msra.mxu0 %v680
    %1015 = vmatprep.subr.bf16.mxu0 %v741
    %1016 = vmatpush2.bf16.msra.mxu0 %v740
    %1017 = vmatprep.subr.bf16.mxu0 %v737
    %1018 = vmatpush2.bf16.msra.mxu0 %v736
    %1019 = vmatprep.subr.bf16.mxu0 %v733
    %1020 = vmatpush2.bf16.msra.mxu0 %v732
    %1021 = vmatprep.subr.bf16.mxu0 %v729
    %1022 = vmatpush2.bf16.msra.mxu0 %v728
    %1023 = vmatprep.subr.bf16.mxu0 %v725
    %1024 = vmatpush2.bf16.msra.mxu0 %v724
    %1025 = vmatprep.subr.bf16.mxu0 %v721
    %1026 = vmatpush2.bf16.msra.mxu0 %v720
    %1027 = vmatprep.subr.bf16.mxu0 %v717
    %1028 = vmatpush2.bf16.msra.mxu0 %v716
    %1029 = vmatprep.subr.bf16.mxu0 %v713
    %1030 = vmatpush2.bf16.msra.mxu0 %v712
    %1031 = vmatprep.mubr.bf16.mxu0 %v225
    %1032 = vmatmul.mubr.bf16.gmra.mxu0 %v224
    %v1033 = vpop.f32.mrf.mxu0
    %v1034 = vadd.f32 %v991, %v1033
    %v1035 = vpop.f32.mrf.mxu0
    %v1036 = vadd.f32 %v993, %v1035
    %v1037 = vpop.f32.mrf.mxu0
    %v1038 = vadd.f32 %v995, %v1037
    %v1039 = vpop.f32.mrf.mxu0
    %v1040 = vadd.f32 %v997, %v1039
    %1041 = vdwg.mxu0
    %v1042 = vmax.f32 %v948, 0.0
    %v1043 = vmax.f32 %v950, 0.0
    %v1044 = vmax.f32 %v1034, 0.0
    %v1045 = vmax.f32 %v1036, 0.0
    %v1046 = vmax.f32 %v952, 0.0
    %v1047 = vmax.f32 %v954, 0.0
    %v1048 = vmax.f32 %v1038, 0.0
    %v1049 = vmax.f32 %v1040, 0.0
    %v1050 = vpack.c.bf16 %v1046, %v1042
    %v1051 = vpack.c.bf16 %v1047, %v1043
    %v1052 = vpack.c.bf16 %v1048, %v1044
    %v1053 = vpack.c.bf16 %v1049, %v1045
    %v1054 = vld [vmem:[#allocation5] sm:$0xff]
    %v1055 = vld [vmem:[#allocation5 + $0x8] sm:$0xff]
    %v1056 = vld [vmem:[#allocation5 + $0x10] sm:$0xff]
    %v1057 = vld [vmem:[#allocation5 + $0x18] sm:$0xff]
    %v1058 = vld [vmem:[#allocation5 + $0x20] sm:$0xff]
    %v1059 = vld [vmem:[#allocation5 + $0x28] sm:$0xff]
    %v1060 = vld [vmem:[#allocation5 + $0x30] sm:$0xff]
    %v1061 = vld [vmem:[#allocation5 + $0x38] sm:$0xff]
    %v1062 = vld [vmem:[#allocation5 + $0x40] sm:$0xff]
    %v1063 = vld [vmem:[#allocation5 + $0x48] sm:$0xff]
    %v1064 = vld [vmem:[#allocation5 + $0x50] sm:$0xff]
    %v1065 = vld [vmem:[#allocation5 + $0x58] sm:$0xff]
    %v1066 = vld [vmem:[#allocation5 + $0x60] sm:$0xff]
    %v1067 = vld [vmem:[#allocation5 + $0x68] sm:$0xff]
    %v1068 = vld [vmem:[#allocation5 + $0x70] sm:$0xff]
    %v1069 = vld [vmem:[#allocation5 + $0x78] sm:$0xff]
    %v1070 = vld [vmem:[#allocation5 + $0x80] sm:$0xff]
    %v1071 = vld [vmem:[#allocation5 + $0x88] sm:$0xff]
    %v1072 = vld [vmem:[#allocation5 + $0x90] sm:$0xff]
    %v1073 = vld [vmem:[#allocation5 + $0x98] sm:$0xff]
    %v1074 = vld [vmem:[#allocation5 + $0xa0] sm:$0xff]
    %v1075 = vld [vmem:[#allocation5 + $0xa8] sm:$0xff]
    %v1076 = vld [vmem:[#allocation5 + $0xb0] sm:$0xff]
    %v1077 = vld [vmem:[#allocation5 + $0xb8] sm:$0xff]
    %v1078 = vld [vmem:[#allocation5 + $0xc0] sm:$0xff]
    %v1079 = vld [vmem:[#allocation5 + $0xc8] sm:$0xff]
    %v1080 = vld [vmem:[#allocation5 + $0xd0] sm:$0xff]
    %v1081 = vld [vmem:[#allocation5 + $0xd8] sm:$0xff]
    %v1082 = vld [vmem:[#allocation5 + $0xe0] sm:$0xff]
    %v1083 = vld [vmem:[#allocation5 + $0xe8] sm:$0xff]
    %v1084 = vld [vmem:[#allocation5 + $0xf0] sm:$0xff]
    %v1085 = vld [vmem:[#allocation5 + $0xf8] sm:$0xff]
    %v1086 = vld [vmem:[#allocation5 + $0x100] sm:$0xff]
    %v1087 = vld [vmem:[#allocation5 + $0x108] sm:$0xff]
    %v1088 = vld [vmem:[#allocation5 + $0x110] sm:$0xff]
    %v1089 = vld [vmem:[#allocation5 + $0x118] sm:$0xff]
    %v1090 = vld [vmem:[#allocation5 + $0x120] sm:$0xff]
    %v1091 = vld [vmem:[#allocation5 + $0x128] sm:$0xff]
    %v1092 = vld [vmem:[#allocation5 + $0x130] sm:$0xff]
    %v1093 = vld [vmem:[#allocation5 + $0x138] sm:$0xff]
    %v1094 = vld [vmem:[#allocation5 + $0x140] sm:$0xff]
    %v1095 = vld [vmem:[#allocation5 + $0x148] sm:$0xff]
    %v1096 = vld [vmem:[#allocation5 + $0x150] sm:$0xff]
    %v1097 = vld [vmem:[#allocation5 + $0x158] sm:$0xff]
    %v1098 = vld [vmem:[#allocation5 + $0x160] sm:$0xff]
    %v1099 = vld [vmem:[#allocation5 + $0x168] sm:$0xff]
    %v1100 = vld [vmem:[#allocation5 + $0x170] sm:$0xff]
    %v1101 = vld [vmem:[#allocation5 + $0x178] sm:$0xff]
    %v1102 = vld [vmem:[#allocation5 + $0x180] sm:$0xff]
    %v1103 = vld [vmem:[#allocation5 + $0x188] sm:$0xff]
    %v1104 = vld [vmem:[#allocation5 + $0x190] sm:$0xff]
    %v1105 = vld [vmem:[#allocation5 + $0x198] sm:$0xff]
    %v1106 = vld [vmem:[#allocation5 + $0x1a0] sm:$0xff]
    %v1107 = vld [vmem:[#allocation5 + $0x1a8] sm:$0xff]
    %v1108 = vld [vmem:[#allocation5 + $0x1b0] sm:$0xff]
    %v1109 = vld [vmem:[#allocation5 + $0x1b8] sm:$0xff]
    %v1110 = vld [vmem:[#allocation5 + $0x1c0] sm:$0xff]
    %v1111 = vld [vmem:[#allocation5 + $0x1c8] sm:$0xff]
    %v1112 = vld [vmem:[#allocation5 + $0x1d0] sm:$0xff]
    %v1113 = vld [vmem:[#allocation5 + $0x1d8] sm:$0xff]
    %v1114 = vld [vmem:[#allocation5 + $0x1e0] sm:$0xff]
    %v1115 = vld [vmem:[#allocation5 + $0x1e8] sm:$0xff]
    %v1116 = vld [vmem:[#allocation5 + $0x1f0] sm:$0xff]
    %v1117 = vld [vmem:[#allocation5 + $0x1f8] sm:$0xff]
    %v1118 = vld [vmem:[#allocation5 + $0x200] sm:$0xff]
    %v1119 = vld [vmem:[#allocation5 + $0x208] sm:$0xff]
    %v1120 = vld [vmem:[#allocation5 + $0x210] sm:$0xff]
    %v1121 = vld [vmem:[#allocation5 + $0x218] sm:$0xff]
    %v1122 = vld [vmem:[#allocation5 + $0x220] sm:$0xff]
    %v1123 = vld [vmem:[#allocation5 + $0x228] sm:$0xff]
    %v1124 = vld [vmem:[#allocation5 + $0x230] sm:$0xff]
    %v1125 = vld [vmem:[#allocation5 + $0x238] sm:$0xff]
    %v1126 = vld [vmem:[#allocation5 + $0x240] sm:$0xff]
    %v1127 = vld [vmem:[#allocation5 + $0x248] sm:$0xff]
    %v1128 = vld [vmem:[#allocation5 + $0x250] sm:$0xff]
    %v1129 = vld [vmem:[#allocation5 + $0x258] sm:$0xff]
    %v1130 = vld [vmem:[#allocation5 + $0x260] sm:$0xff]
    %v1131 = vld [vmem:[#allocation5 + $0x268] sm:$0xff]
    %v1132 = vld [vmem:[#allocation5 + $0x270] sm:$0xff]
    %v1133 = vld [vmem:[#allocation5 + $0x278] sm:$0xff]
    %v1134 = vld [vmem:[#allocation5 + $0x280] sm:$0xff]
    %v1135 = vld [vmem:[#allocation5 + $0x288] sm:$0xff]
    %v1136 = vld [vmem:[#allocation5 + $0x290] sm:$0xff]
    %v1137 = vld [vmem:[#allocation5 + $0x298] sm:$0xff]
    %v1138 = vld [vmem:[#allocation5 + $0x2a0] sm:$0xff]
    %v1139 = vld [vmem:[#allocation5 + $0x2a8] sm:$0xff]
    %v1140 = vld [vmem:[#allocation5 + $0x2b0] sm:$0xff]
    %v1141 = vld [vmem:[#allocation5 + $0x2b8] sm:$0xff]
    %v1142 = vld [vmem:[#allocation5 + $0x2c0] sm:$0xff]
    %v1143 = vld [vmem:[#allocation5 + $0x2c8] sm:$0xff]
    %v1144 = vld [vmem:[#allocation5 + $0x2d0] sm:$0xff]
    %v1145 = vld [vmem:[#allocation5 + $0x2d8] sm:$0xff]
    %v1146 = vld [vmem:[#allocation5 + $0x2e0] sm:$0xff]
    %v1147 = vld [vmem:[#allocation5 + $0x2e8] sm:$0xff]
    %v1148 = vld [vmem:[#allocation5 + $0x2f0] sm:$0xff]
    %v1149 = vld [vmem:[#allocation5 + $0x2f8] sm:$0xff]
    %v1150 = vld [vmem:[#allocation5 + $0x300] sm:$0xff]
    %v1151 = vld [vmem:[#allocation5 + $0x308] sm:$0xff]
    %v1152 = vld [vmem:[#allocation5 + $0x310] sm:$0xff]
    %v1153 = vld [vmem:[#allocation5 + $0x318] sm:$0xff]
    %v1154 = vld [vmem:[#allocation5 + $0x320] sm:$0xff]
    %v1155 = vld [vmem:[#allocation5 + $0x328] sm:$0xff]
    %v1156 = vld [vmem:[#allocation5 + $0x330] sm:$0xff]
    %v1157 = vld [vmem:[#allocation5 + $0x338] sm:$0xff]
    %v1158 = vld [vmem:[#allocation5 + $0x340] sm:$0xff]
    %v1159 = vld [vmem:[#allocation5 + $0x348] sm:$0xff]
    %v1160 = vld [vmem:[#allocation5 + $0x350] sm:$0xff]
    %v1161 = vld [vmem:[#allocation5 + $0x358] sm:$0xff]
    %v1162 = vld [vmem:[#allocation5 + $0x360] sm:$0xff]
    %v1163 = vld [vmem:[#allocation5 + $0x368] sm:$0xff]
    %v1164 = vld [vmem:[#allocation5 + $0x370] sm:$0xff]
    %v1165 = vld [vmem:[#allocation5 + $0x378] sm:$0xff]
    %v1166 = vld [vmem:[#allocation5 + $0x380] sm:$0xff]
    %v1167 = vld [vmem:[#allocation5 + $0x388] sm:$0xff]
    %v1168 = vld [vmem:[#allocation5 + $0x390] sm:$0xff]
    %v1169 = vld [vmem:[#allocation5 + $0x398] sm:$0xff]
    %v1170 = vld [vmem:[#allocation5 + $0x3a0] sm:$0xff]
    %v1171 = vld [vmem:[#allocation5 + $0x3a8] sm:$0xff]
    %v1172 = vld [vmem:[#allocation5 + $0x3b0] sm:$0xff]
    %v1173 = vld [vmem:[#allocation5 + $0x3b8] sm:$0xff]
    %v1174 = vld [vmem:[#allocation5 + $0x3c0] sm:$0xff]
    %v1175 = vld [vmem:[#allocation5 + $0x3c8] sm:$0xff]
    %v1176 = vld [vmem:[#allocation5 + $0x3d0] sm:$0xff]
    %v1177 = vld [vmem:[#allocation5 + $0x3d8] sm:$0xff]
    %v1178 = vld [vmem:[#allocation5 + $0x3e0] sm:$0xff]
    %v1179 = vld [vmem:[#allocation5 + $0x3e8] sm:$0xff]
    %v1180 = vld [vmem:[#allocation5 + $0x3f0] sm:$0xff]
    %v1181 = vld [vmem:[#allocation5 + $0x3f8] sm:$0xff]
    %v1182 = vld [vmem:[%s4] sm:$0xf]
    %v1184 = vlaneseq
    %v1185 = vshrl.u32 %v1184, 7
    %v1186 = vsub.s32 0, %v1185
    %v1187 = vrot.slane %v1182, %v1186
    %v1188 = vlaneseq
    %v1189 = vshrl.u32 %v1188, 7
    %v1190 = vsub.s32 1, %v1189
    %v1191 = vrot.slane %v1182, %v1190
    %v1192 = vlaneseq
    %v1193 = vshrl.u32 %v1192, 7
    %v1194 = vsub.s32 2, %v1193
    %v1195 = vrot.slane %v1182, %v1194
    %v1196 = vlaneseq
    %v1197 = vshrl.u32 %v1196, 7
    %v1198 = vsub.s32 3, %v1197
    %v1199 = vrot.slane %v1182, %v1198
    %v1332 = vunpack.c.l.b16 %v1054
    %v1333 = vunpack.c.h.b16 %v1054
    %v1334 = vunpack.c.l.b16 %v1055
    %v1335 = vunpack.c.h.b16 %v1055
    %v1336 = vunpack.c.l.b16 %v1056
    %v1337 = vunpack.c.h.b16 %v1056
    %v1338 = vunpack.c.l.b16 %v1057
    %v1339 = vunpack.c.h.b16 %v1057
    %v1340 = vunpack.c.l.b16 %v1058
    %v1341 = vunpack.c.h.b16 %v1058
    %v1342 = vunpack.c.l.b16 %v1059
    %v1343 = vunpack.c.h.b16 %v1059
    %v1344 = vunpack.c.l.b16 %v1060
    %v1345 = vunpack.c.h.b16 %v1060
    %v1346 = vunpack.c.l.b16 %v1061
    %v1347 = vunpack.c.h.b16 %v1061
    %v1348 = vunpack.c.l.b16 %v1062
    %v1349 = vunpack.c.h.b16 %v1062
    %v1350 = vunpack.c.l.b16 %v1063
    %v1351 = vunpack.c.h.b16 %v1063
    %v1352 = vunpack.c.l.b16 %v1064
    %v1353 = vunpack.c.h.b16 %v1064
    %v1354 = vunpack.c.l.b16 %v1065
    %v1355 = vunpack.c.h.b16 %v1065
    %v1356 = vunpack.c.l.b16 %v1066
    %v1357 = vunpack.c.h.b16 %v1066
    %v1358 = vunpack.c.l.b16 %v1067
    %v1359 = vunpack.c.h.b16 %v1067
    %v1360 = vunpack.c.l.b16 %v1068
    %v1361 = vunpack.c.h.b16 %v1068
    %v1362 = vunpack.c.l.b16 %v1069
    %v1363 = vunpack.c.h.b16 %v1069
    %v1364 = vunpack.c.l.b16 %v1070
    %v1365 = vunpack.c.h.b16 %v1070
    %v1366 = vunpack.c.l.b16 %v1071
    %v1367 = vunpack.c.h.b16 %v1071
    %v1368 = vunpack.c.l.b16 %v1072
    %v1369 = vunpack.c.h.b16 %v1072
    %v1370 = vunpack.c.l.b16 %v1073
    %v1371 = vunpack.c.h.b16 %v1073
    %v1372 = vunpack.c.l.b16 %v1074
    %v1373 = vunpack.c.h.b16 %v1074
    %v1374 = vunpack.c.l.b16 %v1075
    %v1375 = vunpack.c.h.b16 %v1075
    %v1376 = vunpack.c.l.b16 %v1076
    %v1377 = vunpack.c.h.b16 %v1076
    %v1378 = vunpack.c.l.b16 %v1077
    %v1379 = vunpack.c.h.b16 %v1077
    %v1380 = vunpack.c.l.b16 %v1078
    %v1381 = vunpack.c.h.b16 %v1078
    %v1382 = vunpack.c.l.b16 %v1079
    %v1383 = vunpack.c.h.b16 %v1079
    %v1384 = vunpack.c.l.b16 %v1080
    %v1385 = vunpack.c.h.b16 %v1080
    %v1386 = vunpack.c.l.b16 %v1081
    %v1387 = vunpack.c.h.b16 %v1081
    %v1388 = vunpack.c.l.b16 %v1082
    %v1389 = vunpack.c.h.b16 %v1082
    %v1390 = vunpack.c.l.b16 %v1083
    %v1391 = vunpack.c.h.b16 %v1083
    %v1392 = vunpack.c.l.b16 %v1084
    %v1393 = vunpack.c.h.b16 %v1084
    %v1394 = vunpack.c.l.b16 %v1085
    %v1395 = vunpack.c.h.b16 %v1085
    %v1396 = vunpack.c.l.b16 %v1086
    %v1397 = vunpack.c.h.b16 %v1086
    %v1398 = vunpack.c.l.b16 %v1087
    %v1399 = vunpack.c.h.b16 %v1087
    %v1400 = vunpack.c.l.b16 %v1088
    %v1401 = vunpack.c.h.b16 %v1088
    %v1402 = vunpack.c.l.b16 %v1089
    %v1403 = vunpack.c.h.b16 %v1089
    %v1404 = vunpack.c.l.b16 %v1090
    %v1405 = vunpack.c.h.b16 %v1090
    %v1406 = vunpack.c.l.b16 %v1091
    %v1407 = vunpack.c.h.b16 %v1091
    %v1408 = vunpack.c.l.b16 %v1092
    %v1409 = vunpack.c.h.b16 %v1092
    %v1410 = vunpack.c.l.b16 %v1093
    %v1411 = vunpack.c.h.b16 %v1093
    %v1412 = vunpack.c.l.b16 %v1094
    %v1413 = vunpack.c.h.b16 %v1094
    %v1414 = vunpack.c.l.b16 %v1095
    %v1415 = vunpack.c.h.b16 %v1095
    %v1416 = vunpack.c.l.b16 %v1096
    %v1417 = vunpack.c.h.b16 %v1096
    %v1418 = vunpack.c.l.b16 %v1097
    %v1419 = vunpack.c.h.b16 %v1097
    %v1420 = vunpack.c.l.b16 %v1098
    %v1421 = vunpack.c.h.b16 %v1098
    %v1422 = vunpack.c.l.b16 %v1099
    %v1423 = vunpack.c.h.b16 %v1099
    %v1424 = vunpack.c.l.b16 %v1100
    %v1425 = vunpack.c.h.b16 %v1100
    %v1426 = vunpack.c.l.b16 %v1101
    %v1427 = vunpack.c.h.b16 %v1101
    %v1428 = vunpack.c.l.b16 %v1102
    %v1429 = vunpack.c.h.b16 %v1102
    %v1430 = vunpack.c.l.b16 %v1103
    %v1431 = vunpack.c.h.b16 %v1103
    %v1432 = vunpack.c.l.b16 %v1104
    %v1433 = vunpack.c.h.b16 %v1104
    %v1434 = vunpack.c.l.b16 %v1105
    %v1435 = vunpack.c.h.b16 %v1105
    %v1436 = vunpack.c.l.b16 %v1106
    %v1437 = vunpack.c.h.b16 %v1106
    %v1438 = vunpack.c.l.b16 %v1107
    %v1439 = vunpack.c.h.b16 %v1107
    %v1440 = vunpack.c.l.b16 %v1108
    %v1441 = vunpack.c.h.b16 %v1108
    %v1442 = vunpack.c.l.b16 %v1109
    %v1443 = vunpack.c.h.b16 %v1109
    %v1444 = vunpack.c.l.b16 %v1110
    %v1445 = vunpack.c.h.b16 %v1110
    %v1446 = vunpack.c.l.b16 %v1111
    %v1447 = vunpack.c.h.b16 %v1111
    %v1448 = vunpack.c.l.b16 %v1112
    %v1449 = vunpack.c.h.b16 %v1112
    %v1450 = vunpack.c.l.b16 %v1113
    %v1451 = vunpack.c.h.b16 %v1113
    %v1452 = vunpack.c.l.b16 %v1114
    %v1453 = vunpack.c.h.b16 %v1114
    %v1454 = vunpack.c.l.b16 %v1115
    %v1455 = vunpack.c.h.b16 %v1115
    %v1456 = vunpack.c.l.b16 %v1116
    %v1457 = vunpack.c.h.b16 %v1116
    %v1458 = vunpack.c.l.b16 %v1117
    %v1459 = vunpack.c.h.b16 %v1117
    %v1460 = vunpack.c.l.b16 %v1118
    %v1461 = vunpack.c.h.b16 %v1118
    %v1462 = vunpack.c.l.b16 %v1119
    %v1463 = vunpack.c.h.b16 %v1119
    %v1464 = vunpack.c.l.b16 %v1120
    %v1465 = vunpack.c.h.b16 %v1120
    %v1466 = vunpack.c.l.b16 %v1121
    %v1467 = vunpack.c.h.b16 %v1121
    %v1468 = vunpack.c.l.b16 %v1122
    %v1469 = vunpack.c.h.b16 %v1122
    %v1470 = vunpack.c.l.b16 %v1123
    %v1471 = vunpack.c.h.b16 %v1123
    %v1472 = vunpack.c.l.b16 %v1124
    %v1473 = vunpack.c.h.b16 %v1124
    %v1474 = vunpack.c.l.b16 %v1125
    %v1475 = vunpack.c.h.b16 %v1125
    %v1476 = vunpack.c.l.b16 %v1126
    %v1477 = vunpack.c.h.b16 %v1126
    %v1478 = vunpack.c.l.b16 %v1127
    %v1479 = vunpack.c.h.b16 %v1127
    %v1480 = vunpack.c.l.b16 %v1128
    %v1481 = vunpack.c.h.b16 %v1128
    %v1482 = vunpack.c.l.b16 %v1129
    %v1483 = vunpack.c.h.b16 %v1129
    %v1484 = vunpack.c.l.b16 %v1130
    %v1485 = vunpack.c.h.b16 %v1130
    %v1486 = vunpack.c.l.b16 %v1131
    %v1487 = vunpack.c.h.b16 %v1131
    %v1488 = vunpack.c.l.b16 %v1132
    %v1489 = vunpack.c.h.b16 %v1132
    %v1490 = vunpack.c.l.b16 %v1133
    %v1491 = vunpack.c.h.b16 %v1133
    %v1492 = vunpack.c.l.b16 %v1134
    %v1493 = vunpack.c.h.b16 %v1134
    %v1494 = vunpack.c.l.b16 %v1135
    %v1495 = vunpack.c.h.b16 %v1135
    %v1496 = vunpack.c.l.b16 %v1136
    %v1497 = vunpack.c.h.b16 %v1136
    %v1498 = vunpack.c.l.b16 %v1137
    %v1499 = vunpack.c.h.b16 %v1137
    %v1500 = vunpack.c.l.b16 %v1138
    %v1501 = vunpack.c.h.b16 %v1138
    %v1502 = vunpack.c.l.b16 %v1139
    %v1503 = vunpack.c.h.b16 %v1139
    %v1504 = vunpack.c.l.b16 %v1140
    %v1505 = vunpack.c.h.b16 %v1140
    %v1506 = vunpack.c.l.b16 %v1141
    %v1507 = vunpack.c.h.b16 %v1141
    %v1508 = vunpack.c.l.b16 %v1142
    %v1509 = vunpack.c.h.b16 %v1142
    %v1510 = vunpack.c.l.b16 %v1143
    %v1511 = vunpack.c.h.b16 %v1143
    %v1512 = vunpack.c.l.b16 %v1144
    %v1513 = vunpack.c.h.b16 %v1144
    %v1514 = vunpack.c.l.b16 %v1145
    %v1515 = vunpack.c.h.b16 %v1145
    %v1516 = vunpack.c.l.b16 %v1146
    %v1517 = vunpack.c.h.b16 %v1146
    %v1518 = vunpack.c.l.b16 %v1147
    %v1519 = vunpack.c.h.b16 %v1147
    %v1520 = vunpack.c.l.b16 %v1148
    %v1521 = vunpack.c.h.b16 %v1148
    %v1522 = vunpack.c.l.b16 %v1149
    %v1523 = vunpack.c.h.b16 %v1149
    %v1524 = vunpack.c.l.b16 %v1150
    %v1525 = vunpack.c.h.b16 %v1150
    %v1526 = vunpack.c.l.b16 %v1151
    %v1527 = vunpack.c.h.b16 %v1151
    %v1528 = vunpack.c.l.b16 %v1152
    %v1529 = vunpack.c.h.b16 %v1152
    %v1530 = vunpack.c.l.b16 %v1153
    %v1531 = vunpack.c.h.b16 %v1153
    %v1532 = vunpack.c.l.b16 %v1154
    %v1533 = vunpack.c.h.b16 %v1154
    %v1534 = vunpack.c.l.b16 %v1155
    %v1535 = vunpack.c.h.b16 %v1155
    %v1536 = vunpack.c.l.b16 %v1156
    %v1537 = vunpack.c.h.b16 %v1156
    %v1538 = vunpack.c.l.b16 %v1157
    %v1539 = vunpack.c.h.b16 %v1157
    %v1540 = vunpack.c.l.b16 %v1158
    %v1541 = vunpack.c.h.b16 %v1158
    %v1542 = vunpack.c.l.b16 %v1159
    %v1543 = vunpack.c.h.b16 %v1159
    %v1544 = vunpack.c.l.b16 %v1160
    %v1545 = vunpack.c.h.b16 %v1160
    %v1546 = vunpack.c.l.b16 %v1161
    %v1547 = vunpack.c.h.b16 %v1161
    %v1548 = vunpack.c.l.b16 %v1162
    %v1549 = vunpack.c.h.b16 %v1162
    %v1550 = vunpack.c.l.b16 %v1163
    %v1551 = vunpack.c.h.b16 %v1163
    %v1552 = vunpack.c.l.b16 %v1164
    %v1553 = vunpack.c.h.b16 %v1164
    %v1554 = vunpack.c.l.b16 %v1165
    %v1555 = vunpack.c.h.b16 %v1165
    %v1556 = vunpack.c.l.b16 %v1166
    %v1557 = vunpack.c.h.b16 %v1166
    %v1558 = vunpack.c.l.b16 %v1167
    %v1559 = vunpack.c.h.b16 %v1167
    %v1560 = vunpack.c.l.b16 %v1168
    %v1561 = vunpack.c.h.b16 %v1168
    %v1562 = vunpack.c.l.b16 %v1169
    %v1563 = vunpack.c.h.b16 %v1169
    %v1564 = vunpack.c.l.b16 %v1170
    %v1565 = vunpack.c.h.b16 %v1170
    %v1566 = vunpack.c.l.b16 %v1171
    %v1567 = vunpack.c.h.b16 %v1171
    %v1568 = vunpack.c.l.b16 %v1172
    %v1569 = vunpack.c.h.b16 %v1172
    %v1570 = vunpack.c.l.b16 %v1173
    %v1571 = vunpack.c.h.b16 %v1173
    %v1572 = vunpack.c.l.b16 %v1174
    %v1573 = vunpack.c.h.b16 %v1174
    %v1574 = vunpack.c.l.b16 %v1175
    %v1575 = vunpack.c.h.b16 %v1175
    %v1576 = vunpack.c.l.b16 %v1176
    %v1577 = vunpack.c.h.b16 %v1176
    %v1578 = vunpack.c.l.b16 %v1177
    %v1579 = vunpack.c.h.b16 %v1177
    %v1580 = vunpack.c.l.b16 %v1178
    %v1581 = vunpack.c.h.b16 %v1178
    %v1582 = vunpack.c.l.b16 %v1179
    %v1583 = vunpack.c.h.b16 %v1179
    %v1584 = vunpack.c.l.b16 %v1180
    %v1585 = vunpack.c.h.b16 %v1180
    %v1586 = vunpack.c.l.b16 %v1181
    %v1587 = vunpack.c.h.b16 %v1181
    %v1588 = vpack.c.b16 %v1336, %v1332
    %v1589 = vpack.c.b16 %v1337, %v1333
    %v1590 = vpack.c.b16 %v1338, %v1334
    %v1591 = vpack.c.b16 %v1339, %v1335
    %v1592 = vpack.c.b16 %v1344, %v1340
    %v1593 = vpack.c.b16 %v1345, %v1341
    %v1594 = vpack.c.b16 %v1346, %v1342
    %v1595 = vpack.c.b16 %v1347, %v1343
    %v1596 = vpack.c.b16 %v1352, %v1348
    %v1597 = vpack.c.b16 %v1353, %v1349
    %v1598 = vpack.c.b16 %v1354, %v1350
    %v1599 = vpack.c.b16 %v1355, %v1351
    %v1600 = vpack.c.b16 %v1360, %v1356
    %v1601 = vpack.c.b16 %v1361, %v1357
    %v1602 = vpack.c.b16 %v1362, %v1358
    %v1603 = vpack.c.b16 %v1363, %v1359
    %v1604 = vpack.c.b16 %v1368, %v1364
    %v1605 = vpack.c.b16 %v1369, %v1365
    %v1606 = vpack.c.b16 %v1370, %v1366
    %v1607 = vpack.c.b16 %v1371, %v1367
    %v1608 = vpack.c.b16 %v1376, %v1372
    %v1609 = vpack.c.b16 %v1377, %v1373
    %v1610 = vpack.c.b16 %v1378, %v1374
    %v1611 = vpack.c.b16 %v1379, %v1375
    %v1612 = vpack.c.b16 %v1384, %v1380
    %v1613 = vpack.c.b16 %v1385, %v1381
    %v1614 = vpack.c.b16 %v1386, %v1382
    %v1615 = vpack.c.b16 %v1387, %v1383
    %v1616 = vpack.c.b16 %v1392, %v1388
    %v1617 = vpack.c.b16 %v1393, %v1389
    %v1618 = vpack.c.b16 %v1394, %v1390
    %v1619 = vpack.c.b16 %v1395, %v1391
    %v1620 = vpack.c.b16 %v1400, %v1396
    %v1621 = vpack.c.b16 %v1401, %v1397
    %v1622 = vpack.c.b16 %v1402, %v1398
    %v1623 = vpack.c.b16 %v1403, %v1399
    %v1624 = vpack.c.b16 %v1408, %v1404
    %v1625 = vpack.c.b16 %v1409, %v1405
    %v1626 = vpack.c.b16 %v1410, %v1406
    %v1627 = vpack.c.b16 %v1411, %v1407
    %v1628 = vpack.c.b16 %v1416, %v1412
    %v1629 = vpack.c.b16 %v1417, %v1413
    %v1630 = vpack.c.b16 %v1418, %v1414
    %v1631 = vpack.c.b16 %v1419, %v1415
    %v1632 = vpack.c.b16 %v1424, %v1420
    %v1633 = vpack.c.b16 %v1425, %v1421
    %v1634 = vpack.c.b16 %v1426, %v1422
    %v1635 = vpack.c.b16 %v1427, %v1423
    %v1636 = vpack.c.b16 %v1432, %v1428
    %v1637 = vpack.c.b16 %v1433, %v1429
    %v1638 = vpack.c.b16 %v1434, %v1430
    %v1639 = vpack.c.b16 %v1435, %v1431
    %v1640 = vpack.c.b16 %v1440, %v1436
    %v1641 = vpack.c.b16 %v1441, %v1437
    %v1642 = vpack.c.b16 %v1442, %v1438
    %v1643 = vpack.c.b16 %v1443, %v1439
    %v1644 = vpack.c.b16 %v1448, %v1444
    %v1645 = vpack.c.b16 %v1449, %v1445
    %v1646 = vpack.c.b16 %v1450, %v1446
    %v1647 = vpack.c.b16 %v1451, %v1447
    %v1648 = vpack.c.b16 %v1456, %v1452
    %v1649 = vpack.c.b16 %v1457, %v1453
    %v1650 = vpack.c.b16 %v1458, %v1454
    %v1651 = vpack.c.b16 %v1459, %v1455
    %v1652 = vpack.c.b16 %v1464, %v1460
    %v1653 = vpack.c.b16 %v1465, %v1461
    %v1654 = vpack.c.b16 %v1466, %v1462
    %v1655 = vpack.c.b16 %v1467, %v1463
    %v1656 = vpack.c.b16 %v1472, %v1468
    %v1657 = vpack.c.b16 %v1473, %v1469
    %v1658 = vpack.c.b16 %v1474, %v1470
    %v1659 = vpack.c.b16 %v1475, %v1471
    %v1660 = vpack.c.b16 %v1480, %v1476
    %v1661 = vpack.c.b16 %v1481, %v1477
    %v1662 = vpack.c.b16 %v1482, %v1478
    %v1663 = vpack.c.b16 %v1483, %v1479
    %v1664 = vpack.c.b16 %v1488, %v1484
    %v1665 = vpack.c.b16 %v1489, %v1485
    %v1666 = vpack.c.b16 %v1490, %v1486
    %v1667 = vpack.c.b16 %v1491, %v1487
    %v1668 = vpack.c.b16 %v1496, %v1492
    %v1669 = vpack.c.b16 %v1497, %v1493
    %v1670 = vpack.c.b16 %v1498, %v1494
    %v1671 = vpack.c.b16 %v1499, %v1495
    %v1672 = vpack.c.b16 %v1504, %v1500
    %v1673 = vpack.c.b16 %v1505, %v1501
    %v1674 = vpack.c.b16 %v1506, %v1502
    %v1675 = vpack.c.b16 %v1507, %v1503
    %v1676 = vpack.c.b16 %v1512, %v1508
    %v1677 = vpack.c.b16 %v1513, %v1509
    %v1678 = vpack.c.b16 %v1514, %v1510
    %v1679 = vpack.c.b16 %v1515, %v1511
    %v1680 = vpack.c.b16 %v1520, %v1516
    %v1681 = vpack.c.b16 %v1521, %v1517
    %v1682 = vpack.c.b16 %v1522, %v1518
    %v1683 = vpack.c.b16 %v1523, %v1519
    %v1684 = vpack.c.b16 %v1528, %v1524
    %v1685 = vpack.c.b16 %v1529, %v1525
    %v1686 = vpack.c.b16 %v1530, %v1526
    %v1687 = vpack.c.b16 %v1531, %v1527
    %v1688 = vpack.c.b16 %v1536, %v1532
    %v1689 = vpack.c.b16 %v1537, %v1533
    %v1690 = vpack.c.b16 %v1538, %v1534
    %v1691 = vpack.c.b16 %v1539, %v1535
    %v1692 = vpack.c.b16 %v1544, %v1540
    %v1693 = vpack.c.b16 %v1545, %v1541
    %v1694 = vpack.c.b16 %v1546, %v1542
    %v1695 = vpack.c.b16 %v1547, %v1543
    %v1696 = vpack.c.b16 %v1552, %v1548
    %v1697 = vpack.c.b16 %v1553, %v1549
    %v1698 = vpack.c.b16 %v1554, %v1550
    %v1699 = vpack.c.b16 %v1555, %v1551
    %v1700 = vpack.c.b16 %v1560, %v1556
    %v1701 = vpack.c.b16 %v1561, %v1557
    %v1702 = vpack.c.b16 %v1562, %v1558
    %v1703 = vpack.c.b16 %v1563, %v1559
    %v1704 = vpack.c.b16 %v1568, %v1564
    %v1705 = vpack.c.b16 %v1569, %v1565
    %v1706 = vpack.c.b16 %v1570, %v1566
    %v1707 = vpack.c.b16 %v1571, %v1567
    %v1708 = vpack.c.b16 %v1576, %v1572
    %v1709 = vpack.c.b16 %v1577, %v1573
    %v1710 = vpack.c.b16 %v1578, %v1574
    %v1711 = vpack.c.b16 %v1579, %v1575
    %v1712 = vpack.c.b16 %v1584, %v1580
    %v1713 = vpack.c.b16 %v1585, %v1581
    %v1714 = vpack.c.b16 %v1586, %v1582
    %v1715 = vpack.c.b16 %v1587, %v1583
    %1844 = vmatprep.subr.bf16.mxu0 %v1617
    %1845 = vmatpush1.bf16.msra.mxu0 %v1616
    %1846 = vmatprep.subr.bf16.mxu0 %v1613
    %1847 = vmatpush1.bf16.msra.mxu0 %v1612
    %1848 = vmatprep.subr.bf16.mxu0 %v1609
    %1849 = vmatpush1.bf16.msra.mxu0 %v1608
    %1850 = vmatprep.subr.bf16.mxu0 %v1605
    %1851 = vmatpush1.bf16.msra.mxu0 %v1604
    %1852 = vmatprep.subr.bf16.mxu0 %v1601
    %1853 = vmatpush1.bf16.msra.mxu0 %v1600
    %1854 = vmatprep.subr.bf16.mxu0 %v1597
    %1855 = vmatpush1.bf16.msra.mxu0 %v1596
    %1856 = vmatprep.subr.bf16.mxu0 %v1593
    %1857 = vmatpush1.bf16.msra.mxu0 %v1592
    %1858 = vmatprep.subr.bf16.mxu0 %v1589
    %1859 = vmatpush1.bf16.msra.mxu0 %v1588
    %1860 = vmatprep.subr.bf16.mxu0 %v1649
    %1861 = vmatpush2.bf16.msra.mxu0 %v1648
    %1862 = vmatprep.subr.bf16.mxu0 %v1645
    %1863 = vmatpush2.bf16.msra.mxu0 %v1644
    %1864 = vmatprep.subr.bf16.mxu0 %v1641
    %1865 = vmatpush2.bf16.msra.mxu0 %v1640
    %1866 = vmatprep.subr.bf16.mxu0 %v1637
    %1867 = vmatpush2.bf16.msra.mxu0 %v1636
    %1868 = vmatprep.subr.bf16.mxu0 %v1633
    %1869 = vmatpush2.bf16.msra.mxu0 %v1632
    %1870 = vmatprep.subr.bf16.mxu0 %v1629
    %1871 = vmatpush2.bf16.msra.mxu0 %v1628
    %1872 = vmatprep.subr.bf16.mxu0 %v1625
    %1873 = vmatpush2.bf16.msra.mxu0 %v1624
    %1874 = vmatprep.subr.bf16.mxu0 %v1621
    %1875 = vmatpush2.bf16.msra.mxu0 %v1620
    %1876 = vmatprep.mubr.bf16.mxu0 %v1051
    %1877 = vmatmul.mubr.bf16.gmra.mxu0 %v1050
    %v1878 = vpop.f32.mrf.mxu0
    %v1879 = vadd.f32 %v1187, %v1878
    %v1880 = vpop.f32.mrf.mxu0
    %v1881 = vadd.f32 %v1191, %v1880
    %v1882 = vpop.f32.mrf.mxu0
    %v1883 = vadd.f32 %v1187, %v1882
    %v1884 = vpop.f32.mrf.mxu0
    %v1885 = vadd.f32 %v1191, %v1884
    %1886 = vdwg.mxu0
    %1887 = vmatprep.subr.bf16.mxu0 %v1681
    %1888 = vmatpush1.bf16.msra.mxu0 %v1680
    %1889 = vmatprep.subr.bf16.mxu0 %v1677
    %1890 = vmatpush1.bf16.msra.mxu0 %v1676
    %1891 = vmatprep.subr.bf16.mxu0 %v1673
    %1892 = vmatpush1.bf16.msra.mxu0 %v1672
    %1893 = vmatprep.subr.bf16.mxu0 %v1669
    %1894 = vmatpush1.bf16.msra.mxu0 %v1668
    %1895 = vmatprep.subr.bf16.mxu0 %v1665
    %1896 = vmatpush1.bf16.msra.mxu0 %v1664
    %1897 = vmatprep.subr.bf16.mxu0 %v1661
    %1898 = vmatpush1.bf16.msra.mxu0 %v1660
    %1899 = vmatprep.subr.bf16.mxu0 %v1657
    %1900 = vmatpush1.bf16.msra.mxu0 %v1656
    %1901 = vmatprep.subr.bf16.mxu0 %v1653
    %1902 = vmatpush1.bf16.msra.mxu0 %v1652
    %1903 = vmatprep.subr.bf16.mxu0 %v1713
    %1904 = vmatpush2.bf16.msra.mxu0 %v1712
    %1905 = vmatprep.subr.bf16.mxu0 %v1709
    %1906 = vmatpush2.bf16.msra.mxu0 %v1708
    %1907 = vmatprep.subr.bf16.mxu0 %v1705
    %1908 = vmatpush2.bf16.msra.mxu0 %v1704
    %1909 = vmatprep.subr.bf16.mxu0 %v1701
    %1910 = vmatpush2.bf16.msra.mxu0 %v1700
    %1911 = vmatprep.subr.bf16.mxu0 %v1697
    %1912 = vmatpush2.bf16.msra.mxu0 %v1696
    %1913 = vmatprep.subr.bf16.mxu0 %v1693
    %1914 = vmatpush2.bf16.msra.mxu0 %v1692
    %1915 = vmatprep.subr.bf16.mxu0 %v1689
    %1916 = vmatpush2.bf16.msra.mxu0 %v1688
    %1917 = vmatprep.subr.bf16.mxu0 %v1685
    %1918 = vmatpush2.bf16.msra.mxu0 %v1684
    %1919 = vmatprep.mubr.bf16.mxu0 %v1053
    %1920 = vmatmul.mubr.bf16.gmra.mxu0 %v1052
    %v1921 = vpop.f32.mrf.mxu0
    %v1922 = vadd.f32 %v1879, %v1921
    %v1923 = vpop.f32.mrf.mxu0
    %v1924 = vadd.f32 %v1881, %v1923
    %v1925 = vpop.f32.mrf.mxu0
    %v1926 = vadd.f32 %v1883, %v1925
    %v1927 = vpop.f32.mrf.mxu0
    %v1928 = vadd.f32 %v1885, %v1927
    %1929 = vdwg.mxu0
    %1930 = vmatprep.subr.bf16.mxu0 %v1619
    %1931 = vmatpush1.bf16.msra.mxu0 %v1618
    %1932 = vmatprep.subr.bf16.mxu0 %v1615
    %1933 = vmatpush1.bf16.msra.mxu0 %v1614
    %1934 = vmatprep.subr.bf16.mxu0 %v1611
    %1935 = vmatpush1.bf16.msra.mxu0 %v1610
    %1936 = vmatprep.subr.bf16.mxu0 %v1607
    %1937 = vmatpush1.bf16.msra.mxu0 %v1606
    %1938 = vmatprep.subr.bf16.mxu0 %v1603
    %1939 = vmatpush1.bf16.msra.mxu0 %v1602
    %1940 = vmatprep.subr.bf16.mxu0 %v1599
    %1941 = vmatpush1.bf16.msra.mxu0 %v1598
    %1942 = vmatprep.subr.bf16.mxu0 %v1595
    %1943 = vmatpush1.bf16.msra.mxu0 %v1594
    %1944 = vmatprep.subr.bf16.mxu0 %v1591
    %1945 = vmatpush1.bf16.msra.mxu0 %v1590
    %1946 = vmatprep.subr.bf16.mxu0 %v1651
    %1947 = vmatpush2.bf16.msra.mxu0 %v1650
    %1948 = vmatprep.subr.bf16.mxu0 %v1647
    %1949 = vmatpush2.bf16.msra.mxu0 %v1646
    %1950 = vmatprep.subr.bf16.mxu0 %v1643
    %1951 = vmatpush2.bf16.msra.mxu0 %v1642
    %1952 = vmatprep.subr.bf16.mxu0 %v1639
    %1953 = vmatpush2.bf16.msra.mxu0 %v1638
    %1954 = vmatprep.subr.bf16.mxu0 %v1635
    %1955 = vmatpush2.bf16.msra.mxu0 %v1634
    %1956 = vmatprep.subr.bf16.mxu0 %v1631
    %1957 = vmatpush2.bf16.msra.mxu0 %v1630
    %1958 = vmatprep.subr.bf16.mxu0 %v1627
    %1959 = vmatpush2.bf16.msra.mxu0 %v1626
    %1960 = vmatprep.subr.bf16.mxu0 %v1623
    %1961 = vmatpush2.bf16.msra.mxu0 %v1622
    %1962 = vmatprep.mubr.bf16.mxu0 %v1051
    %1963 = vmatmul.mubr.bf16.gmra.mxu0 %v1050
    %v1964 = vpop.f32.mrf.mxu0
    %v1965 = vadd.f32 %v1195, %v1964
    %v1966 = vpop.f32.mrf.mxu0
    %v1967 = vadd.f32 %v1199, %v1966
    %v1968 = vpop.f32.mrf.mxu0
    %v1969 = vadd.f32 %v1195, %v1968
    %v1970 = vpop.f32.mrf.mxu0
    %v1971 = vadd.f32 %v1199, %v1970
    %1972 = vdwg.mxu0
    %1973 = vmatprep.subr.bf16.mxu0 %v1683
    %1974 = vmatpush1.bf16.msra.mxu0 %v1682
    %1975 = vmatprep.subr.bf16.mxu0 %v1679
    %1976 = vmatpush1.bf16.msra.mxu0 %v1678
    %1977 = vmatprep.subr.bf16.mxu0 %v1675
    %1978 = vmatpush1.bf16.msra.mxu0 %v1674
    %1979 = vmatprep.subr.bf16.mxu0 %v1671
    %1980 = vmatpush1.bf16.msra.mxu0 %v1670
    %1981 = vmatprep.subr.bf16.mxu0 %v1667
    %1982 = vmatpush1.bf16.msra.mxu0 %v1666
    %1983 = vmatprep.subr.bf16.mxu0 %v1663
    %1984 = vmatpush1.bf16.msra.mxu0 %v1662
    %1985 = vmatprep.subr.bf16.mxu0 %v1659
    %1986 = vmatpush1.bf16.msra.mxu0 %v1658
    %1987 = vmatprep.subr.bf16.mxu0 %v1655
    %1988 = vmatpush1.bf16.msra.mxu0 %v1654
    %1989 = vmatprep.subr.bf16.mxu0 %v1715
    %1990 = vmatpush2.bf16.msra.mxu0 %v1714
    %1991 = vmatprep.subr.bf16.mxu0 %v1711
    %1992 = vmatpush2.bf16.msra.mxu0 %v1710
    %1993 = vmatprep.subr.bf16.mxu0 %v1707
    %1994 = vmatpush2.bf16.msra.mxu0 %v1706
    %1995 = vmatprep.subr.bf16.mxu0 %v1703
    %1996 = vmatpush2.bf16.msra.mxu0 %v1702
    %1997 = vmatprep.subr.bf16.mxu0 %v1699
    %1998 = vmatpush2.bf16.msra.mxu0 %v1698
    %1999 = vmatprep.subr.bf16.mxu0 %v1695
    %2000 = vmatpush2.bf16.msra.mxu0 %v1694
    %2001 = vmatprep.subr.bf16.mxu0 %v1691
    %2002 = vmatpush2.bf16.msra.mxu0 %v1690
    %2003 = vmatprep.subr.bf16.mxu0 %v1687
    %2004 = vmatpush2.bf16.msra.mxu0 %v1686
    %2005 = vmatprep.mubr.bf16.mxu0 %v1053
    %2006 = vmatmul.mubr.bf16.gmra.mxu0 %v1052
    %v2007 = vpop.f32.mrf.mxu0
    %v2008 = vadd.f32 %v1965, %v2007
    %v2009 = vpop.f32.mrf.mxu0
    %v2010 = vadd.f32 %v1967, %v2009
    %v2011 = vpop.f32.mrf.mxu0
    %v2012 = vadd.f32 %v1969, %v2011
    %v2013 = vpop.f32.mrf.mxu0
    %v2014 = vadd.f32 %v1971, %v2013
    %2015 = vdwg.mxu0
    %v2016 = vmax.f32 %v1922, 0.0
    %v2017 = vmax.f32 %v1924, 0.0
    %v2018 = vmax.f32 %v2008, 0.0
    %v2019 = vmax.f32 %v2010, 0.0
    %v2020 = vmax.f32 %v1926, 0.0
    %v2021 = vmax.f32 %v1928, 0.0
    %v2022 = vmax.f32 %v2012, 0.0
    %v2023 = vmax.f32 %v2014, 0.0
    %v2024 = vld [vmem:[%s5] sm:$0xf]
    %v2026 = vlaneseq
    %v2027 = vshrl.u32 %v2026, 7
    %v2028 = vsub.s32 0, %v2027
    %v2029 = vrot.slane %v2024, %v2028
    %v2030 = vlaneseq
    %v2031 = vshrl.u32 %v2030, 7
    %v2032 = vsub.s32 1, %v2031
    %v2033 = vrot.slane %v2024, %v2032
    %v2034 = vlaneseq
    %v2035 = vshrl.u32 %v2034, 7
    %v2036 = vsub.s32 2, %v2035
    %v2037 = vrot.slane %v2024, %v2036
    %v2038 = vlaneseq
    %v2039 = vshrl.u32 %v2038, 7
    %v2040 = vsub.s32 3, %v2039
    %v2041 = vrot.slane %v2024, %v2040
    %v2046 = vmul.f32 %v2016, %v2029
    %v2047 = vmul.f32 %v2017, %v2033
    %v2048 = vmul.f32 %v2018, %v2037
    %v2049 = vmul.f32 %v2019, %v2041
    %v2050 = vmul.f32 %v2020, %v2029
    %v2051 = vmul.f32 %v2021, %v2033
    %v2052 = vmul.f32 %v2022, %v2037
    %v2053 = vmul.f32 %v2023, %v2041
    %v2054 = vadd.f32 %v2046, %v2047
    %v2055 = vadd.f32 %v2054, %v2048
    %v2056 = vadd.f32 %v2055, %v2049
    %2057 = vadd.xlane.f32.xlu0 %v2056
    %v2058 = vpop.xlane.xlu0 %2057
    %v2059 = vadd.f32 %v2050, %v2051
    %v2060 = vadd.f32 %v2059, %v2052
    %v2061 = vadd.f32 %v2060, %v2053
    %2062 = vadd.xlane.f32.xlu0 %v2061
    %v2063 = vpop.xlane.xlu0 %2062
    %v2064 = vld [vmem:[#allocation2] sm:$0x1]
    %v2066 = vlaneseq
    %v2067 = vshrl.u32 %v2066, 7
    %v2068 = vsub.s32 0, %v2067
    %v2069 = vrot.slane %v2064, %v2068
    %v2071 = vadd.f32 %v2058, %v2069
    %v2072 = vadd.f32 %v2063, %v2069
    %v2073 = vxor.u32 %v2071, 2147483648
    %v2074 = vxor.u32 %v2072, 2147483648
    %v2075 = vmul.f32 %v2073, 1.442695
    %v2076 = vpow.pop %v2075
    %v2077 = vmul.f32 %v2074, 1.442695
    %v2078 = vpow.pop %v2077
    %v2079 = vadd.f32 %v2076, 1.0
    %v2080 = vadd.f32 %v2078, 1.0
    %v2081 = vrcp.pop %v2079
    %v2082 = vmul.f32 1.0, %v2081
    %v2083 = vrcp.pop %v2080
    %v2084 = vmul.f32 1.0, %v2083
    %vm2085 = vcmask 7168
    %2086 = vst.msk [vmem:[%s7] sm:$0xff] %vm2085, %v2082
    %2087 = vst.msk [vmem:[%s7 + $0x8] sm:$0xff] %vm2085, %v2084
    // Predicated region
    $region38: #{domain_cl_forward.1} parent=1 // pred_check
      _
    $region39: #{domain_cl_forward.1} parent=1 // pred_check_branch
      %2089 = sbr.rel (0) target = $region41
    $region40: #{domain_cl_forward.1} parent=1 // pred_region
      _
    $region41: #{domain_cl_forward.1} parent=1 // pred_fallthru
      _
    // Predicated region
    $region42: #{domain_cl_forward.1} parent=1 // pred_check
      _
    $region43: #{domain_cl_forward.1} parent=1 // pred_check_branch
      %2091 = sbr.rel (0) target = $region45
    $region44: #{domain_cl_forward.1} parent=1 // pred_region
      _
    $region45: #{domain_cl_forward.1} parent=1 // pred_fallthru
      _
    %2092 = vsyncpa [#allocation4], 1
    %2093 = vsyncpa [#allocation6], 1

</llo_original>
